<compile_context>
chip_gen: v7x
topology: tpu7x:2x2x1
jax: 0.10.0
libtpu: 0.0.40
codegen_flags: <defaults>
</compile_context>

<pallas_src>
import functools

import jax
import jax.numpy as jnp
import numpy as np
from jax.experimental import pallas as pl
from jax.experimental.pallas import tpu as pltpu


def mha_kernel(x_ref, wqkv_ref, bqkv_ref, wo_ref, bo_ref, o_ref, *,
               num_heads, head_dim):
    H, D = num_heads, head_dim
    B, N, E = x_ref.shape

    # ---- Fused QKV projection: one lane-dense 2D MXU matmul ----------------
    # (B, N) merges onto sublanes (leading-dim merge, no lane/sublane
    # relayout).  Wqkv columns are [Q_h0..Q_hH-1 | K_* | V_*] with the
    # 1/sqrt(emb_size) scale already folded into the Q block wrapper-side.
    x2 = x_ref[...].reshape(B * N, E)                                  # (B*N, E)
    qkv = jnp.dot(x2, wqkv_ref[...],
                  preferred_element_type=jnp.float32) + bqkv_ref[...]  # (B*N, 3E)
    qkv = qkv.reshape(B, N, 3 * E)                                     # leading-dim split

    # ---- Per-head attention (static head loop; batch is the einsum batch) --
    ctx_heads = []
    for h in range(H):
        q = qkv[:, :, h * D:(h + 1) * D]                               # (B, N, D)
        k = qkv[:, :, E + h * D:E + (h + 1) * D]                       # (B, N, D)
        v = qkv[:, :, 2 * E + h * D:2 * E + (h + 1) * D]               # (B, N, D)

        energy = jnp.einsum('bnd,bmd->bnm', q, k,
                            preferred_element_type=jnp.float32)        # (B, N, N)
        m = jnp.max(energy, axis=-1, keepdims=True)
        p = jnp.exp(energy - m)
        denom = jnp.sum(p, axis=-1, keepdims=True)
        att = p * pl.reciprocal(denom, approx=True)                    # EUP divide
        # TODO(synk): att_drop (nn.Dropout) is identity in eval mode; no RNG.
        ctx_heads.append(jnp.einsum('bnm,bmd->bnd', att, v,
                                    preferred_element_type=jnp.float32))

    # ---- Output projection: one matmul; head-sum happens inside the MXU ----
    ctx = jnp.concatenate(ctx_heads, axis=-1)                          # (B, N, E)
    out = jnp.dot(ctx.reshape(B * N, E), wo_ref[...],
                  preferred_element_type=jnp.float32) + bo_ref[...]    # (B*N, E)
    o_ref[...] = out.reshape(B, N, E).astype(o_ref.dtype)


def multi_head_attention(x, params, *, num_heads):
    """x: (B, N, E) float32.  params: (in, out)-layout weights, (1, E) biases."""
    B, N, E = x.shape
    H = num_heads
    assert E % H == 0
    D = E // H

    # eegconformer divides the energy by sqrt(emb_size) (not sqrt(head_dim));
    # fold that scale into the query projection so the kernel never applies it.
    scale = 1.0 / (E ** 0.5)
    wqkv = jnp.concatenate([params["wq"] * scale, params["wk"], params["wv"]],
                           axis=1)                                     # (E, 3E)
    bqkv = jnp.concatenate([params["bq"] * scale, params["bk"], params["bv"]],
                           axis=1)                                     # (1, 3E)
    wo, bo = params["wo"], params["bo"]                                # (E, E), (1, E)

    kernel = functools.partial(mha_kernel, num_heads=H, head_dim=D)

    def full_spec(shape):
        return pl.BlockSpec(shape, lambda i: (0,) * len(shape))

    return pl.pallas_call(
        kernel,
        out_shape=jax.ShapeDtypeStruct((B, N, E), x.dtype),
        grid_spec=pltpu.PrefetchScalarGridSpec(
            num_scalar_prefetch=0,
            grid=(1,),            # single grid step: whole batch resident in VMEM
            in_specs=[
                full_spec((B, N, E)),        # x
                full_spec((E, 3 * E)),       # fused Wqkv (scale folded into Q)
                full_spec((1, 3 * E)),       # fused bqkv (scale folded into Q)
                full_spec((E, E)),           # Wo
                full_spec((1, E)),           # bo
            ],
            out_specs=full_spec((B, N, E)),
        ),
        compiler_params=pltpu.CompilerParams(
            dimension_semantics=("arbitrary",)),
    )(x, wqkv, bqkv, wo, bo)


def reference_mha(x, params, *, num_heads):
    """Pure-JAX reference replicating the PyTorch forward (eval mode)."""
    B, N, E = x.shape
    D = E // num_heads
    scaling = E ** 0.5

    def lin(x, w, b):
        return jnp.einsum('bne,ef->bnf', x, w) + b[0]

    q = lin(x, params["wq"], params["bq"]).reshape(B, N, num_heads, D).transpose(0, 2, 1, 3)
    k = lin(x, params["wk"], params["bk"]).reshape(B, N, num_heads, D).transpose(0, 2, 1, 3)
    v = lin(x, params["wv"], params["bv"]).reshape(B, N, num_heads, D).transpose(0, 2, 1, 3)
    energy = jnp.einsum('bhqd,bhkd->bhqk', q, k)
    att = jax.nn.softmax(energy / scaling, axis=-1)
    out = jnp.einsum('bhqk,bhkd->bhqd', att, v)
    out = out.transpose(0, 2, 1, 3).reshape(B, N, E)
    return lin(out, params["wo"], params["bo"])


def init_params(key, emb_size):
    """Deterministic synthetic weights; shapes per nn.Linear(emb, emb)."""
    keys = jax.random.split(key, 8)
    bound = 1.0 / (emb_size ** 0.5)

    def w(k):  # stored already transposed: (in, out)
        return jax.random.uniform(k, (emb_size, emb_size), jnp.float32, -bound, bound)

    def b(k):
        return jax.random.uniform(k, (1, emb_size), jnp.float32, -bound, bound)

    return {
        "wq": w(keys[0]), "bq": b(keys[1]),
        "wk": w(keys[2]), "bk": b(keys[3]),
        "wv": w(keys[4]), "bv": b(keys[5]),
        "wo": w(keys[6]), "bo": b(keys[7]),
    }


if __name__ == "__main__":
    B, N, E, H = 2, 8, 32, 4          # batch, seq, emb_size, num_heads

    key = jax.random.PRNGKey(0)
    kx, kp = jax.random.split(key)
    x = jax.random.normal(kx, (B, N, E), jnp.float32)
    params = init_params(kp, E)

    out = jax.block_until_ready(multi_head_attention(x, params, num_heads=H))
    ref = jax.block_until_ready(reference_mha(x, params, num_heads=H))

    assert out.shape == (B, N, E)
    # Tolerance covers the EUP approximate reciprocal in the softmax.
    np.testing.assert_allclose(np.asarray(out), np.asarray(ref), rtol=2e-3, atol=2e-3)

    print("KERNEL_OK")
</pallas_src>

<mosaic_0001>
module attributes {stable_mosaic.version = 11 : i64} {
  func.func @mha_kernel(%arg0: i32, %arg1: memref<2x8x32xf32, #tpu.memory_space<vmem>>, %arg2: memref<32x96xf32, #tpu.memory_space<vmem>>, %arg3: memref<1x96xf32, #tpu.memory_space<vmem>>, %arg4: memref<32x32xf32, #tpu.memory_space<vmem>>, %arg5: memref<1x32xf32, #tpu.memory_space<vmem>>, %arg6: memref<2x8x32xf32, #tpu.memory_space<vmem>>) attributes {dimension_semantics = [#tpu.dimension_semantics<arbitrary>], iteration_bounds = array<i64: 1>, scalar_prefetch = 0 : i64, scratch_operands = 0 : i64, tpu.core_type = #tpu.core_type<tc>, window_params = [{pipeline_mode = #tpu.pipeline_mode<synchronous>, transform_indices = @transform_0, window_bounds = array<i64: 2, 8, 32>}, {pipeline_mode = #tpu.pipeline_mode<synchronous>, transform_indices = @transform_1, window_bounds = array<i64: 32, 96>}, {pipeline_mode = #tpu.pipeline_mode<synchronous>, transform_indices = @transform_2, window_bounds = array<i64: 1, 96>}, {pipeline_mode = #tpu.pipeline_mode<synchronous>, transform_indices = @transform_3, window_bounds = array<i64: 32, 32>}, {pipeline_mode = #tpu.pipeline_mode<synchronous>, transform_indices = @transform_4, window_bounds = array<i64: 1, 32>}, {pipeline_mode = #tpu.pipeline_mode<synchronous>, transform_indices = @transform_5, window_bounds = array<i64: 2, 8, 32>}]} {
    %c0 = arith.constant 0 : index
    %c0_0 = arith.constant 0 : index
    %c0_1 = arith.constant 0 : index
    %0 = vector.load %arg1[%c0, %c0_0, %c0_1] : memref<2x8x32xf32, #tpu.memory_space<vmem>>, vector<2x8x32xf32>
    %1 = vector.shape_cast %0 : vector<2x8x32xf32> to vector<16x32xf32>
    %c0_2 = arith.constant 0 : index
    %c0_3 = arith.constant 0 : index
    %2 = vector.load %arg2[%c0_2, %c0_3] : memref<32x96xf32, #tpu.memory_space<vmem>>, vector<32x96xf32>
    %cst = arith.constant dense<0.000000e+00> : vector<16x96xf32>
    %3 = tpu.matmul %1, %2, %cst {dimension_numbers = #tpu.dot_dimension_numbers<[1], [0], [0], [1], [0, 0, 1, 1], [], []>} : vector<16x32xf32>, vector<32x96xf32>, vector<16x96xf32> -> vector<16x96xf32>
    %c0_4 = arith.constant 0 : index
    %c0_5 = arith.constant 0 : index
    %4 = vector.load %arg3[%c0_4, %c0_5] : memref<1x96xf32, #tpu.memory_space<vmem>>, vector<1x96xf32>
    %5 = vector.broadcast %4 : vector<1x96xf32> to vector<16x96xf32>
    %6 = arith.addf %3, %5 : vector<16x96xf32>
    %7 = vector.shape_cast %6 : vector<16x96xf32> to vector<2x8x96xf32>
    %8 = vector.extract_strided_slice %7 {offsets = [0, 0, 0], sizes = [2, 8, 8], strides = [1, 1, 1]} : vector<2x8x96xf32> to vector<2x8x8xf32>
    %9 = vector.extract_strided_slice %7 {offsets = [0, 0, 32], sizes = [2, 8, 8], strides = [1, 1, 1]} : vector<2x8x96xf32> to vector<2x8x8xf32>
    %10 = vector.extract_strided_slice %7 {offsets = [0, 0, 64], sizes = [2, 8, 8], strides = [1, 1, 1]} : vector<2x8x96xf32> to vector<2x8x8xf32>
    "tpu.trace_start"() <{level = 10 : i32, message = "bnd,bmd->bnm"}> : () -> ()
    %cst_6 = arith.constant dense<0.000000e+00> : vector<2x8x8xf32>
    %11 = tpu.matmul %8, %9, %cst_6 {dimension_numbers = #tpu.dot_dimension_numbers<[2], [2], [1], [1], [0, 0, 0, 1, 1, 1], [0], [0]>} : vector<2x8x8xf32>, vector<2x8x8xf32>, vector<2x8x8xf32> -> vector<2x8x8xf32>
    "tpu.trace_stop"() : () -> ()
    %cst_7 = arith.constant dense<0xFF800000> : vector<2x8xf32>
    %12 = vector.multi_reduction <maximumf>, %11, %cst_7 [2] : vector<2x8x8xf32> to vector<2x8xf32>
    %13 = vector.shape_cast %12 : vector<2x8xf32> to vector<2x8x1xf32>
    %14 = vector.broadcast %13 : vector<2x8x1xf32> to vector<2x8x8xf32>
    %15 = arith.subf %11, %14 : vector<2x8x8xf32>
    %16 = math.exp %15 : vector<2x8x8xf32>
    %cst_8 = arith.constant dense<0.000000e+00> : vector<2x8xf32>
    %17 = vector.multi_reduction <add>, %16, %cst_8 [2] : vector<2x8x8xf32> to vector<2x8xf32>
    %18 = vector.shape_cast %17 : vector<2x8xf32> to vector<2x8x1xf32>
    %19 = tpu.reciprocal %18 {approx = true} : vector<2x8x1xf32> -> vector<2x8x1xf32>
    %20 = vector.broadcast %19 : vector<2x8x1xf32> to vector<2x8x8xf32>
    %21 = arith.mulf %16, %20 : vector<2x8x8xf32>
    "tpu.trace_start"() <{level = 10 : i32, message = "bnm,bmd->bnd"}> : () -> ()
    %cst_9 = arith.constant dense<0.000000e+00> : vector<2x8x8xf32>
    %22 = tpu.matmul %21, %10, %cst_9 {dimension_numbers = #tpu.dot_dimension_numbers<[2], [1], [1], [2], [0, 0, 0, 1, 1, 2], [0], [0]>} : vector<2x8x8xf32>, vector<2x8x8xf32>, vector<2x8x8xf32> -> vector<2x8x8xf32>
    "tpu.trace_stop"() : () -> ()
    %23 = vector.extract_strided_slice %7 {offsets = [0, 0, 8], sizes = [2, 8, 8], strides = [1, 1, 1]} : vector<2x8x96xf32> to vector<2x8x8xf32>
    %24 = vector.extract_strided_slice %7 {offsets = [0, 0, 40], sizes = [2, 8, 8], strides = [1, 1, 1]} : vector<2x8x96xf32> to vector<2x8x8xf32>
    %25 = vector.extract_strided_slice %7 {offsets = [0, 0, 72], sizes = [2, 8, 8], strides = [1, 1, 1]} : vector<2x8x96xf32> to vector<2x8x8xf32>
    "tpu.trace_start"() <{level = 10 : i32, message = "bnd,bmd->bnm"}> : () -> ()
    %cst_10 = arith.constant dense<0.000000e+00> : vector<2x8x8xf32>
    %26 = tpu.matmul %23, %24, %cst_10 {dimension_numbers = #tpu.dot_dimension_numbers<[2], [2], [1], [1], [0, 0, 0, 1, 1, 1], [0], [0]>} : vector<2x8x8xf32>, vector<2x8x8xf32>, vector<2x8x8xf32> -> vector<2x8x8xf32>
    "tpu.trace_stop"() : () -> ()
    %cst_11 = arith.constant dense<0xFF800000> : vector<2x8xf32>
    %27 = vector.multi_reduction <maximumf>, %26, %cst_11 [2] : vector<2x8x8xf32> to vector<2x8xf32>
    %28 = vector.shape_cast %27 : vector<2x8xf32> to vector<2x8x1xf32>
    %29 = vector.broadcast %28 : vector<2x8x1xf32> to vector<2x8x8xf32>
    %30 = arith.subf %26, %29 : vector<2x8x8xf32>
    %31 = math.exp %30 : vector<2x8x8xf32>
    %cst_12 = arith.constant dense<0.000000e+00> : vector<2x8xf32>
    %32 = vector.multi_reduction <add>, %31, %cst_12 [2] : vector<2x8x8xf32> to vector<2x8xf32>
    %33 = vector.shape_cast %32 : vector<2x8xf32> to vector<2x8x1xf32>
    %34 = tpu.reciprocal %33 {approx = true} : vector<2x8x1xf32> -> vector<2x8x1xf32>
    %35 = vector.broadcast %34 : vector<2x8x1xf32> to vector<2x8x8xf32>
    %36 = arith.mulf %31, %35 : vector<2x8x8xf32>
    "tpu.trace_start"() <{level = 10 : i32, message = "bnm,bmd->bnd"}> : () -> ()
    %cst_13 = arith.constant dense<0.000000e+00> : vector<2x8x8xf32>
    %37 = tpu.matmul %36, %25, %cst_13 {dimension_numbers = #tpu.dot_dimension_numbers<[2], [1], [1], [2], [0, 0, 0, 1, 1, 2], [0], [0]>} : vector<2x8x8xf32>, vector<2x8x8xf32>, vector<2x8x8xf32> -> vector<2x8x8xf32>
    "tpu.trace_stop"() : () -> ()
    %38 = vector.extract_strided_slice %7 {offsets = [0, 0, 16], sizes = [2, 8, 8], strides = [1, 1, 1]} : vector<2x8x96xf32> to vector<2x8x8xf32>
    %39 = vector.extract_strided_slice %7 {offsets = [0, 0, 48], sizes = [2, 8, 8], strides = [1, 1, 1]} : vector<2x8x96xf32> to vector<2x8x8xf32>
    %40 = vector.extract_strided_slice %7 {offsets = [0, 0, 80], sizes = [2, 8, 8], strides = [1, 1, 1]} : vector<2x8x96xf32> to vector<2x8x8xf32>
    "tpu.trace_start"() <{level = 10 : i32, message = "bnd,bmd->bnm"}> : () -> ()
    %cst_14 = arith.constant dense<0.000000e+00> : vector<2x8x8xf32>
    %41 = tpu.matmul %38, %39, %cst_14 {dimension_numbers = #tpu.dot_dimension_numbers<[2], [2], [1], [1], [0, 0, 0, 1, 1, 1], [0], [0]>} : vector<2x8x8xf32>, vector<2x8x8xf32>, vector<2x8x8xf32> -> vector<2x8x8xf32>
    "tpu.trace_stop"() : () -> ()
    %cst_15 = arith.constant dense<0xFF800000> : vector<2x8xf32>
    %42 = vector.multi_reduction <maximumf>, %41, %cst_15 [2] : vector<2x8x8xf32> to vector<2x8xf32>
    %43 = vector.shape_cast %42 : vector<2x8xf32> to vector<2x8x1xf32>
    %44 = vector.broadcast %43 : vector<2x8x1xf32> to vector<2x8x8xf32>
    %45 = arith.subf %41, %44 : vector<2x8x8xf32>
    %46 = math.exp %45 : vector<2x8x8xf32>
    %cst_16 = arith.constant dense<0.000000e+00> : vector<2x8xf32>
    %47 = vector.multi_reduction <add>, %46, %cst_16 [2] : vector<2x8x8xf32> to vector<2x8xf32>
    %48 = vector.shape_cast %47 : vector<2x8xf32> to vector<2x8x1xf32>
    %49 = tpu.reciprocal %48 {approx = true} : vector<2x8x1xf32> -> vector<2x8x1xf32>
    %50 = vector.broadcast %49 : vector<2x8x1xf32> to vector<2x8x8xf32>
    %51 = arith.mulf %46, %50 : vector<2x8x8xf32>
    "tpu.trace_start"() <{level = 10 : i32, message = "bnm,bmd->bnd"}> : () -> ()
    %cst_17 = arith.constant dense<0.000000e+00> : vector<2x8x8xf32>
    %52 = tpu.matmul %51, %40, %cst_17 {dimension_numbers = #tpu.dot_dimension_numbers<[2], [1], [1], [2], [0, 0, 0, 1, 1, 2], [0], [0]>} : vector<2x8x8xf32>, vector<2x8x8xf32>, vector<2x8x8xf32> -> vector<2x8x8xf32>
    "tpu.trace_stop"() : () -> ()
    %53 = vector.extract_strided_slice %7 {offsets = [0, 0, 24], sizes = [2, 8, 8], strides = [1, 1, 1]} : vector<2x8x96xf32> to vector<2x8x8xf32>
    %54 = vector.extract_strided_slice %7 {offsets = [0, 0, 56], sizes = [2, 8, 8], strides = [1, 1, 1]} : vector<2x8x96xf32> to vector<2x8x8xf32>
    %55 = vector.extract_strided_slice %7 {offsets = [0, 0, 88], sizes = [2, 8, 8], strides = [1, 1, 1]} : vector<2x8x96xf32> to vector<2x8x8xf32>
    "tpu.trace_start"() <{level = 10 : i32, message = "bnd,bmd->bnm"}> : () -> ()
    %cst_18 = arith.constant dense<0.000000e+00> : vector<2x8x8xf32>
    %56 = tpu.matmul %53, %54, %cst_18 {dimension_numbers = #tpu.dot_dimension_numbers<[2], [2], [1], [1], [0, 0, 0, 1, 1, 1], [0], [0]>} : vector<2x8x8xf32>, vector<2x8x8xf32>, vector<2x8x8xf32> -> vector<2x8x8xf32>
    "tpu.trace_stop"() : () -> ()
    %cst_19 = arith.constant dense<0xFF800000> : vector<2x8xf32>
    %57 = vector.multi_reduction <maximumf>, %56, %cst_19 [2] : vector<2x8x8xf32> to vector<2x8xf32>
    %58 = vector.shape_cast %57 : vector<2x8xf32> to vector<2x8x1xf32>
    %59 = vector.broadcast %58 : vector<2x8x1xf32> to vector<2x8x8xf32>
    %60 = arith.subf %56, %59 : vector<2x8x8xf32>
    %61 = math.exp %60 : vector<2x8x8xf32>
    %cst_20 = arith.constant dense<0.000000e+00> : vector<2x8xf32>
    %62 = vector.multi_reduction <add>, %61, %cst_20 [2] : vector<2x8x8xf32> to vector<2x8xf32>
    %63 = vector.shape_cast %62 : vector<2x8xf32> to vector<2x8x1xf32>
    %64 = tpu.reciprocal %63 {approx = true} : vector<2x8x1xf32> -> vector<2x8x1xf32>
    %65 = vector.broadcast %64 : vector<2x8x1xf32> to vector<2x8x8xf32>
    %66 = arith.mulf %61, %65 : vector<2x8x8xf32>
    "tpu.trace_start"() <{level = 10 : i32, message = "bnm,bmd->bnd"}> : () -> ()
    %cst_21 = arith.constant dense<0.000000e+00> : vector<2x8x8xf32>
    %67 = tpu.matmul %66, %55, %cst_21 {dimension_numbers = #tpu.dot_dimension_numbers<[2], [1], [1], [2], [0, 0, 0, 1, 1, 2], [0], [0]>} : vector<2x8x8xf32>, vector<2x8x8xf32>, vector<2x8x8xf32> -> vector<2x8x8xf32>
    "tpu.trace_stop"() : () -> ()
    %68 = tpu.concatenate %22, %37, %52, %67 in 2 : vector<2x8x8xf32>, vector<2x8x8xf32>, vector<2x8x8xf32>, vector<2x8x8xf32> -> vector<2x8x32xf32>
    %69 = vector.shape_cast %68 : vector<2x8x32xf32> to vector<16x32xf32>
    %c0_22 = arith.constant 0 : index
    %c0_23 = arith.constant 0 : index
    %70 = vector.load %arg4[%c0_22, %c0_23] : memref<32x32xf32, #tpu.memory_space<vmem>>, vector<32x32xf32>
    %cst_24 = arith.constant dense<0.000000e+00> : vector<16x32xf32>
    %71 = tpu.matmul %69, %70, %cst_24 {dimension_numbers = #tpu.dot_dimension_numbers<[1], [0], [0], [1], [0, 0, 1, 1], [], []>} : vector<16x32xf32>, vector<32x32xf32>, vector<16x32xf32> -> vector<16x32xf32>
    %c0_25 = arith.constant 0 : index
    %c0_26 = arith.constant 0 : index
    %72 = vector.load %arg5[%c0_25, %c0_26] : memref<1x32xf32, #tpu.memory_space<vmem>>, vector<1x32xf32>
    %73 = vector.broadcast %72 : vector<1x32xf32> to vector<16x32xf32>
    %74 = arith.addf %71, %73 : vector<16x32xf32>
    %75 = vector.shape_cast %74 : vector<16x32xf32> to vector<2x8x32xf32>
    %c0_27 = arith.constant 0 : index
    %c0_28 = arith.constant 0 : index
    %c0_29 = arith.constant 0 : index
    %76 = vector.load %arg6[%c0_27, %c0_28, %c0_29] : memref<2x8x32xf32, #tpu.memory_space<vmem>>, vector<2x8x32xf32>
    tpu.vector_store %arg6[%c0_27, %c0_28, %c0_29], %75 {strides = array<i32>} : memref<2x8x32xf32, #tpu.memory_space<vmem>>, vector<2x8x32xf32>,
    return
  }
  func.func @transform_0(%arg0: i32) -> (i32, i32, i32) {
    %c0_i32 = arith.constant 0 : i32
    %c0_i32_0 = arith.constant 0 : i32
    %c0_i32_1 = arith.constant 0 : i32
    %c0_i32_2 = arith.constant 0 : i32
    return %c0_i32, %c0_i32_0, %c0_i32_1 : i32, i32, i32
  }
  func.func @transform_1(%arg0: i32) -> (i32, i32) {
    %c0_i32 = arith.constant 0 : i32
    %c0_i32_0 = arith.constant 0 : i32
    %c0_i32_1 = arith.constant 0 : i32
    return %c0_i32, %c0_i32_0 : i32, i32
  }
  func.func @transform_2(%arg0: i32) -> (i32, i32) {
    %c0_i32 = arith.constant 0 : i32
    %c0_i32_0 = arith.constant 0 : i32
    %c0_i32_1 = arith.constant 0 : i32
    return %c0_i32, %c0_i32_0 : i32, i32
  }
  func.func @transform_3(%arg0: i32) -> (i32, i32) {
    %c0_i32 = arith.constant 0 : i32
    %c0_i32_0 = arith.constant 0 : i32
    %c0_i32_1 = arith.constant 0 : i32
    return %c0_i32, %c0_i32_0 : i32, i32
  }
  func.func @transform_4(%arg0: i32) -> (i32, i32) {
    %c0_i32 = arith.constant 0 : i32
    %c0_i32_0 = arith.constant 0 : i32
    %c0_i32_1 = arith.constant 0 : i32
    return %c0_i32, %c0_i32_0 : i32, i32
  }
  func.func @transform_5(%arg0: i32) -> (i32, i32, i32) {
    %c0_i32 = arith.constant 0 : i32
    %c0_i32_0 = arith.constant 0 : i32
    %c0_i32_1 = arith.constant 0 : i32
    %c0_i32_2 = arith.constant 0 : i32
    return %c0_i32, %c0_i32_0, %c0_i32_1 : i32, i32, i32
  }
}

</mosaic_0001>

<llo_original>
// kernel: tpu_custom_call.1
$region0: #{tpu_custom_call.1}
  #allocation0 [shape = 'u32[]', space=smem, size = 0x4, offset = 0x4, fixed_abs, tag = 'smem constant byte address 0x4 - core index']
  #allocation1 [shape = 'u32[144,128]{1,0:T(1,128)}', space=vmem, size = 0x12000, scoped, tag = 'internal scratch']
  %s0 = inlined_call_operand.hbm [shape: f32[2,8,32], index: 0, kind: input, shape index: {}]
  %s1 = inlined_call_operand.hbm [shape: f32[32,96], index: 1, kind: input, shape index: {}]
  %s2 = inlined_call_operand.vmem [shape: f32[1,96], index: 2, kind: input, shape index: {}]
  %s3 = inlined_call_operand.hbm [shape: f32[32,32], index: 3, kind: input, shape index: {}]
  %s4 = inlined_call_operand.vmem [shape: f32[1,32], index: 4, kind: input, shape index: {}]
  %s5 = inlined_call_operand.hbm [shape: f32[2,8,32], index: 5, kind: output, shape index: {}]
  %s6 = sld [smem:[#allocation0]]
  $region42: #{tpu_custom_call.1} parent=0
    _
  %s8 = ssub.s32 1, %s6
  %s9 = scalar_select 0, %s8, %s6
  $region1: #{tpu_custom_call.1} parent=0
    #allocation2 [shape = 'u8[8192]{0}', space=vmem, size = 0x2000, scoped, tag = 'input window, operand 0, single buffered']
    #allocation3 [shape = 's32[1]{0}', space=sflag, size = 0x4, scoped, tag = 'scoped memory for tpu_custom_call.1']
    #allocation4 [shape = 's32[1]{0}', space=sflag, size = 0x4, scoped, tag = 'scoped memory for tpu_custom_call.1']
    #allocation5 [shape = 'u8[16384]{0}', space=vmem, size = 0x4000, scoped, tag = 'input window, operand 1, single buffered']
    #allocation6 [shape = 's32[1]{0}', space=sflag, size = 0x4, scoped, tag = 'scoped memory for tpu_custom_call.1']
    #allocation7 [shape = 'u8[16384]{0}', space=vmem, size = 0x4000, scoped, tag = 'input window, operand 3, single buffered']
    #allocation8 [shape = 'u8[8192]{0}', space=vmem, size = 0x2000, scoped, tag = 'output window, operand 0, single buffered']
    %10 = vsyncpa [#allocation3], 0
    %11 = vsyncpa [#allocation6], 0
    %12 = vsyncpa [#allocation4], 0
    // Predicated region
    $region2: #{tpu_custom_call.1} parent=1 // pred_check
      _
    $region3: #{tpu_custom_call.1} parent=1 // pred_check_branch
      %14 = sbr.rel (0) target = $region5
    $region4: #{tpu_custom_call.1} parent=1 // pred_region
      %s16 = ssub.s32 256, 256
      %17 = vsyncadd [#allocation3], %s16
      %s18 = sshll.u32 [#allocation2], 4
      %s19 = int_to_ptr.vmem [resolvable:$true] %s18
      %24 = dma.hbm_to_vmem [thread:$0]  %s0, 256, %s19, [#allocation3], 128, 128, 8
    $region5: #{tpu_custom_call.1} parent=1 // pred_fallthru
      _
    // Predicated region
    $region6: #{tpu_custom_call.1} parent=1 // pred_check
      _
    $region7: #{tpu_custom_call.1} parent=1 // pred_check_branch
      %26 = sbr.rel (0) target = $region9
    $region8: #{tpu_custom_call.1} parent=1 // pred_region
      %s28 = ssub.s32 512, 512
      %29 = vsyncadd [#allocation6], %s28
      %s30 = sshll.u32 [#allocation5], 4
      %s31 = int_to_ptr.vmem [resolvable:$true] %s30
      %36 = dma.hbm_to_vmem [thread:$0]  %s1, 512, %s31, [#allocation6], 128, 128, 8
    $region9: #{tpu_custom_call.1} parent=1 // pred_fallthru
      _
    // Predicated region
    $region10: #{tpu_custom_call.1} parent=1 // pred_check
      _
    $region11: #{tpu_custom_call.1} parent=1 // pred_check_branch
      %38 = sbr.rel (0) target = $region13
    $region12: #{tpu_custom_call.1} parent=1 // pred_region
      _
    $region13: #{tpu_custom_call.1} parent=1 // pred_fallthru
      _
    // Predicated region
    $region14: #{tpu_custom_call.1} parent=1 // pred_check
      _
    $region15: #{tpu_custom_call.1} parent=1 // pred_check_branch
      %40 = sbr.rel (0) target = $region17
    $region16: #{tpu_custom_call.1} parent=1 // pred_region
      %s42 = ssub.s32 512, 512
      %43 = vsyncadd [#allocation6], %s42
      %s44 = sshll.u32 [#allocation7], 4
      %s45 = int_to_ptr.vmem [resolvable:$true] %s44
      %50 = dma.hbm_to_vmem [thread:$0]  %s3, 512, %s45, [#allocation6], 128, 128, 8
    $region17: #{tpu_custom_call.1} parent=1 // pred_fallthru
      _
    // Predicated region
    $region18: #{tpu_custom_call.1} parent=1 // pred_check
      _
    $region19: #{tpu_custom_call.1} parent=1 // pred_check_branch
      %52 = sbr.rel (0) target = $region21
    $region20: #{tpu_custom_call.1} parent=1 // pred_region
      _
    $region21: #{tpu_custom_call.1} parent=1 // pred_fallthru
      _
    // Predicated region
    $region22: #{tpu_custom_call.1} parent=1 // pred_check
      _
    $region23: #{tpu_custom_call.1} parent=1 // pred_check_branch
      %54 = sbr.rel (0) target = $region25
    $region24: #{tpu_custom_call.1} parent=1 // pred_region
      %55 = dma.done [#allocation3], 256
    $region25: #{tpu_custom_call.1} parent=1 // pred_fallthru
      _
    // Predicated region
    $region26: #{tpu_custom_call.1} parent=1 // pred_check
      _
    $region27: #{tpu_custom_call.1} parent=1 // pred_check_branch
      %57 = sbr.rel (0) target = $region29
    $region28: #{tpu_custom_call.1} parent=1 // pred_region
      %58 = dma.done [#allocation6], 512
    $region29: #{tpu_custom_call.1} parent=1 // pred_fallthru
      _
    // Predicated region
    $region30: #{tpu_custom_call.1} parent=1 // pred_check
      _
    $region31: #{tpu_custom_call.1} parent=1 // pred_check_branch
      %60 = sbr.rel (0) target = $region33
    $region32: #{tpu_custom_call.1} parent=1 // pred_region
      %61 = dma.done [#allocation6], 512
    $region33: #{tpu_custom_call.1} parent=1 // pred_fallthru
      _
    %v62 = vld [vmem:[#allocation2] sm:$0xff]
    %v63 = vld [vmem:[#allocation2 + $0x8] sm:$0xff]
    %v64 = vld [vmem:[#allocation5] sm:$0xff]
    %v65 = vld [vmem:[#allocation5 + $0x8] sm:$0xff]
    %v66 = vld [vmem:[#allocation5 + $0x10] sm:$0xff]
    %v67 = vld [vmem:[#allocation5 + $0x18] sm:$0xff]
    %v68 = vld [vmem:[%s2] sm:$0x1]
    %v70 = vlaneseq
    %v71 = vshrl.u32 %v70, 7
    %v72 = vsub.s32 0, %v71
    %v73 = vrot.slane %v68, %v72
    %vm75 = vcmask 261120
    %v77 = vsel %vm75, %v62, 0
    %v80 = vsel %vm75, %v63, 0
    %82 = vmatprep.subr.mxu0 0.0
    %83 = vmatpush1.msra.mxu0 %v64
    %84 = vmatprep.subr.mxu0 0.0
    %85 = vmatpush1.msra.mxu0 %v65
    %86 = vmatprep.subr.mxu0 0.0
    %87 = vmatpush1.msra.mxu0 %v66
    %88 = vmatprep.subr.mxu0 0.0
    %89 = vmatpush1.msra.mxu0 %v67
    %90 = vmatprep.subr.mxu0 0.0
    %91 = vmatpush1.msra.mxu0 0.0
    %92 = vmatprep.subr.mxu0 0.0
    %93 = vmatpush1.msra.mxu0 0.0
    %94 = vmatprep.subr.mxu0 0.0
    %95 = vmatpush1.msra.mxu0 0.0
    %96 = vmatprep.subr.mxu0 0.0
    %97 = vmatpush1.msra.mxu0 0.0
    %98 = vmatprep.subr.mxu0 0.0
    %99 = vmatpush1.msra.mxu0 0.0
    %100 = vmatprep.subr.mxu0 0.0
    %101 = vmatpush1.msra.mxu0 0.0
    %102 = vmatprep.subr.mxu0 0.0
    %103 = vmatpush1.msra.mxu0 0.0
    %104 = vmatprep.subr.mxu0 0.0
    %105 = vmatpush1.msra.mxu0 0.0
    %106 = vmatprep.subr.mxu0 0.0
    %107 = vmatpush1.msra.mxu0 0.0
    %108 = vmatprep.subr.mxu0 0.0
    %109 = vmatpush1.msra.mxu0 0.0
    %110 = vmatprep.subr.mxu0 0.0
    %111 = vmatpush1.msra.mxu0 0.0
    %112 = vmatprep.subr.mxu0 0.0
    %113 = vmatpush1.msra.mxu0 0.0
    %114 = vmatprep.subr.mxu0 0.0
    %115 = vmatpush1.msra.mxu0 0.0
    %116 = vmatprep.subr.mxu0 0.0
    %117 = vmatpush1.msra.mxu0 0.0
    %118 = vmatprep.subr.mxu0 0.0
    %119 = vmatpush1.msra.mxu0 0.0
    %120 = vmatprep.subr.mxu0 0.0
    %121 = vmatpush1.msra.mxu0 0.0
    %122 = vmatprep.subr.mxu0 0.0
    %123 = vmatpush1.msra.mxu0 0.0
    %124 = vmatprep.subr.mxu0 0.0
    %125 = vmatpush1.msra.mxu0 0.0
    %126 = vmatprep.subr.mxu0 0.0
    %127 = vmatpush1.msra.mxu0 0.0
    %128 = vmatprep.subr.mxu0 0.0
    %129 = vmatpush1.msra.mxu0 0.0
    %130 = vmatprep.subr.mxu0 0.0
    %131 = vmatpush1.msra.mxu0 0.0
    %132 = vmatprep.subr.mxu0 0.0
    %133 = vmatpush1.msra.mxu0 0.0
    %134 = vmatprep.subr.mxu0 0.0
    %135 = vmatpush1.msra.mxu0 0.0
    %136 = vmatprep.subr.mxu0 0.0
    %137 = vmatpush1.msra.mxu0 0.0
    %138 = vmatprep.subr.mxu0 0.0
    %139 = vmatpush1.msra.mxu0 0.0
    %140 = vmatprep.subr.mxu0 0.0
    %141 = vmatpush1.msra.mxu0 0.0
    %142 = vmatprep.subr.mxu0 0.0
    %143 = vmatpush1.msra.mxu0 0.0
    %144 = vmatprep.subr.mxu0 0.0
    %145 = vmatpush1.msra.mxu0 0.0
    %146 = vmatprep.mubr.f32.mxu0 0.0
    %147 = vmatmul.mubr.f32.gmra.mrb[0].mxu0 %v77
    %v148 = vpop.f32.mrb[0].mxu0
    %v149 = vadd.f32 %v73, %v148
    %v150 = vpop.f32.mrb[0].mxu0
    %151 = vmatprep.mubr.f32.mxu0 0.0
    %152 = vmatmul.mubr.f32.gmra.mrb[0].mxu0 %v80
    %v153 = vpop.f32.mrb[0].mxu0
    %v154 = vadd.f32 %v73, %v153
    %v155 = vpop.f32.mrb[0].mxu0
    %156 = vdwg.mxu0
    %158 = vrot.lane.b32.xlu0 %v149, 96
    %v159 = vpop.permute.xlu0 %158
    %vm160 = vcmask 64512
    %v161 = vsel %vm160, %v149, 0
    %v163 = vsel %vm160, %v159, 0
    %165 = vmatprep.subr.mxu0 0.0
    %166 = vmatpush1.xpose.msra.mxu0 %v163
    %167 = vmatprep.subr.mxu0 0.0
    %168 = vmatpush1.xpose.msra.mxu0 0.0
    %169 = vmatprep.subr.mxu0 0.0
    %170 = vmatpush1.xpose.msra.mxu0 0.0
    %171 = vmatprep.subr.mxu0 0.0
    %172 = vmatpush1.xpose.msra.mxu0 0.0
    %173 = vmatprep.subr.mxu0 0.0
    %174 = vmatpush1.xpose.msra.mxu0 0.0
    %175 = vmatprep.subr.mxu0 0.0
    %176 = vmatpush1.xpose.msra.mxu0 0.0
    %177 = vmatprep.subr.mxu0 0.0
    %178 = vmatpush1.xpose.msra.mxu0 0.0
    %179 = vmatprep.subr.mxu0 0.0
    %180 = vmatpush1.xpose.msra.mxu0 0.0
    %181 = vmatprep.subr.mxu0 0.0
    %182 = vmatpush1.xpose.msra.mxu0 0.0
    %183 = vmatprep.subr.mxu0 0.0
    %184 = vmatpush1.xpose.msra.mxu0 0.0
    %185 = vmatprep.subr.mxu0 0.0
    %186 = vmatpush1.xpose.msra.mxu0 0.0
    %187 = vmatprep.subr.mxu0 0.0
    %188 = vmatpush1.xpose.msra.mxu0 0.0
    %189 = vmatprep.subr.mxu0 0.0
    %190 = vmatpush1.xpose.msra.mxu0 0.0
    %191 = vmatprep.subr.mxu0 0.0
    %192 = vmatpush1.xpose.msra.mxu0 0.0
    %193 = vmatprep.subr.mxu0 0.0
    %194 = vmatpush1.xpose.msra.mxu0 0.0
    %195 = vmatprep.subr.mxu0 0.0
    %196 = vmatpush1.xpose.msra.mxu0 0.0
    %197 = vmatprep.subr.mxu0 0.0
    %198 = vmatpush1.xpose.msra.mxu0 0.0
    %199 = vmatprep.subr.mxu0 0.0
    %200 = vmatpush1.xpose.msra.mxu0 0.0
    %201 = vmatprep.subr.mxu0 0.0
    %202 = vmatpush1.xpose.msra.mxu0 0.0
    %203 = vmatprep.subr.mxu0 0.0
    %204 = vmatpush1.xpose.msra.mxu0 0.0
    %205 = vmatprep.subr.mxu0 0.0
    %206 = vmatpush1.xpose.msra.mxu0 0.0
    %207 = vmatprep.subr.mxu0 0.0
    %208 = vmatpush1.xpose.msra.mxu0 0.0
    %209 = vmatprep.subr.mxu0 0.0
    %210 = vmatpush1.xpose.msra.mxu0 0.0
    %211 = vmatprep.subr.mxu0 0.0
    %212 = vmatpush1.xpose.msra.mxu0 0.0
    %213 = vmatprep.subr.mxu0 0.0
    %214 = vmatpush1.xpose.msra.mxu0 0.0
    %215 = vmatprep.subr.mxu0 0.0
    %216 = vmatpush1.xpose.msra.mxu0 0.0
    %217 = vmatprep.subr.mxu0 0.0
    %218 = vmatpush1.xpose.msra.mxu0 0.0
    %219 = vmatprep.subr.mxu0 0.0
    %220 = vmatpush1.xpose.msra.mxu0 0.0
    %221 = vmatprep.subr.mxu0 0.0
    %222 = vmatpush1.xpose.msra.mxu0 0.0
    %223 = vmatprep.subr.mxu0 0.0
    %224 = vmatpush1.xpose.msra.mxu0 0.0
    %225 = vmatprep.subr.mxu0 0.0
    %226 = vmatpush1.xpose.msra.mxu0 0.0
    %227 = vmatprep.subr.mxu0 0.0
    %228 = vmatpush1.xpose.msra.mxu0 0.0
    %229 = vmatprep.mubr.f32.mxu0 0.0
    %230 = vmatmul.mubr.f32.gmra.mrb[0].mxu0 %v161
    %v231 = vpop.f32.mrb[0].mxu0
    %v232 = vadd.f32 0.0, %v231
    %v233 = vpop.f32.mrb[0].mxu0
    %234 = vdwg.mxu0
    %236 = vrot.lane.b32.xlu0 %v154, 96
    %v237 = vpop.permute.xlu0 %236
    %v238 = vsel %vm160, %v154, 0
    %v240 = vsel %vm160, %v237, 0
    %242 = vmatprep.subr.mxu0 0.0
    %243 = vmatpush1.xpose.msra.mxu0 %v240
    %244 = vmatprep.subr.mxu0 0.0
    %245 = vmatpush1.xpose.msra.mxu0 0.0
    %246 = vmatprep.subr.mxu0 0.0
    %247 = vmatpush1.xpose.msra.mxu0 0.0
    %248 = vmatprep.subr.mxu0 0.0
    %249 = vmatpush1.xpose.msra.mxu0 0.0
    %250 = vmatprep.subr.mxu0 0.0
    %251 = vmatpush1.xpose.msra.mxu0 0.0
    %252 = vmatprep.subr.mxu0 0.0
    %253 = vmatpush1.xpose.msra.mxu0 0.0
    %254 = vmatprep.subr.mxu0 0.0
    %255 = vmatpush1.xpose.msra.mxu0 0.0
    %256 = vmatprep.subr.mxu0 0.0
    %257 = vmatpush1.xpose.msra.mxu0 0.0
    %258 = vmatprep.subr.mxu0 0.0
    %259 = vmatpush1.xpose.msra.mxu0 0.0
    %260 = vmatprep.subr.mxu0 0.0
    %261 = vmatpush1.xpose.msra.mxu0 0.0
    %262 = vmatprep.subr.mxu0 0.0
    %263 = vmatpush1.xpose.msra.mxu0 0.0
    %264 = vmatprep.subr.mxu0 0.0
    %265 = vmatpush1.xpose.msra.mxu0 0.0
    %266 = vmatprep.subr.mxu0 0.0
    %267 = vmatpush1.xpose.msra.mxu0 0.0
    %268 = vmatprep.subr.mxu0 0.0
    %269 = vmatpush1.xpose.msra.mxu0 0.0
    %270 = vmatprep.subr.mxu0 0.0
    %271 = vmatpush1.xpose.msra.mxu0 0.0
    %272 = vmatprep.subr.mxu0 0.0
    %273 = vmatpush1.xpose.msra.mxu0 0.0
    %274 = vmatprep.subr.mxu0 0.0
    %275 = vmatpush1.xpose.msra.mxu0 0.0
    %276 = vmatprep.subr.mxu0 0.0
    %277 = vmatpush1.xpose.msra.mxu0 0.0
    %278 = vmatprep.subr.mxu0 0.0
    %279 = vmatpush1.xpose.msra.mxu0 0.0
    %280 = vmatprep.subr.mxu0 0.0
    %281 = vmatpush1.xpose.msra.mxu0 0.0
    %282 = vmatprep.subr.mxu0 0.0
    %283 = vmatpush1.xpose.msra.mxu0 0.0
    %284 = vmatprep.subr.mxu0 0.0
    %285 = vmatpush1.xpose.msra.mxu0 0.0
    %286 = vmatprep.subr.mxu0 0.0
    %287 = vmatpush1.xpose.msra.mxu0 0.0
    %288 = vmatprep.subr.mxu0 0.0
    %289 = vmatpush1.xpose.msra.mxu0 0.0
    %290 = vmatprep.subr.mxu0 0.0
    %291 = vmatpush1.xpose.msra.mxu0 0.0
    %292 = vmatprep.subr.mxu0 0.0
    %293 = vmatpush1.xpose.msra.mxu0 0.0
    %294 = vmatprep.subr.mxu0 0.0
    %295 = vmatpush1.xpose.msra.mxu0 0.0
    %296 = vmatprep.subr.mxu0 0.0
    %297 = vmatpush1.xpose.msra.mxu0 0.0
    %298 = vmatprep.subr.mxu0 0.0
    %299 = vmatpush1.xpose.msra.mxu0 0.0
    %300 = vmatprep.subr.mxu0 0.0
    %301 = vmatpush1.xpose.msra.mxu0 0.0
    %302 = vmatprep.subr.mxu0 0.0
    %303 = vmatpush1.xpose.msra.mxu0 0.0
    %304 = vmatprep.subr.mxu0 0.0
    %305 = vmatpush1.xpose.msra.mxu0 0.0
    %306 = vmatprep.mubr.f32.mxu0 0.0
    %307 = vmatmul.mubr.f32.gmra.mrb[0].mxu0 %v238
    %v308 = vpop.f32.mrb[0].mxu0
    %v309 = vadd.f32 0.0, %v308
    %v310 = vpop.f32.mrb[0].mxu0
    %311 = vdwg.mxu0
    %v312 = vsel %vm160, %v232, -inf
    %313 = vmax.xlane.f32.xlu0 %v312
    %v314 = vpop.xlane.xlu0 %313
    %v315 = vsel %vm160, %v309, -inf
    %316 = vmax.xlane.f32.xlu0 %v315
    %v317 = vpop.xlane.xlu0 %316
    %v318 = vsub.f32 %v232, %v314
    %v319 = vsub.f32 %v309, %v317
    %v320 = vmul.f32 %v318, 1.442695
    %v321 = vpow.pop %v320
    %v322 = vmul.f32 %v319, 1.442695
    %v323 = vpow.pop %v322
    %v324 = vsel %vm160, %v321, 0.0
    %325 = vadd.xlane.f32.xlu0 %v324
    %v326 = vpop.xlane.xlu0 %325
    %v327 = vsel %vm160, %v323, 0.0
    %328 = vadd.xlane.f32.xlu0 %v327
    %v329 = vpop.xlane.xlu0 %328
    %v330 = vrcp.pop %v326
    %v331 = vrcp.pop %v329
    %v332 = vmul.f32 %v321, %v330
    %v333 = vmul.f32 %v323, %v331
    %334 = vrot.lane.b32.xlu0 %v149, 64
    %v335 = vpop.permute.xlu0 %334
    %v338 = vsel %vm160, %v332, 0
    %340 = vmatprep.subr.mxu0 0.0
    %341 = vmatpush1.msra.mxu0 %v335
    %342 = vmatprep.subr.mxu0 0.0
    %343 = vmatpush1.msra.mxu0 0.0
    %344 = vmatprep.subr.mxu0 0.0
    %345 = vmatpush1.msra.mxu0 0.0
    %346 = vmatprep.subr.mxu0 0.0
    %347 = vmatpush1.msra.mxu0 0.0
    %348 = vmatprep.subr.mxu0 0.0
    %349 = vmatpush1.msra.mxu0 0.0
    %350 = vmatprep.subr.mxu0 0.0
    %351 = vmatpush1.msra.mxu0 0.0
    %352 = vmatprep.subr.mxu0 0.0
    %353 = vmatpush1.msra.mxu0 0.0
    %354 = vmatprep.subr.mxu0 0.0
    %355 = vmatpush1.msra.mxu0 0.0
    %356 = vmatprep.subr.mxu0 0.0
    %357 = vmatpush1.msra.mxu0 0.0
    %358 = vmatprep.subr.mxu0 0.0
    %359 = vmatpush1.msra.mxu0 0.0
    %360 = vmatprep.subr.mxu0 0.0
    %361 = vmatpush1.msra.mxu0 0.0
    %362 = vmatprep.subr.mxu0 0.0
    %363 = vmatpush1.msra.mxu0 0.0
    %364 = vmatprep.subr.mxu0 0.0
    %365 = vmatpush1.msra.mxu0 0.0
    %366 = vmatprep.subr.mxu0 0.0
    %367 = vmatpush1.msra.mxu0 0.0
    %368 = vmatprep.subr.mxu0 0.0
    %369 = vmatpush1.msra.mxu0 0.0
    %370 = vmatprep.subr.mxu0 0.0
    %371 = vmatpush1.msra.mxu0 0.0
    %372 = vmatprep.subr.mxu0 0.0
    %373 = vmatpush1.msra.mxu0 0.0
    %374 = vmatprep.subr.mxu0 0.0
    %375 = vmatpush1.msra.mxu0 0.0
    %376 = vmatprep.subr.mxu0 0.0
    %377 = vmatpush1.msra.mxu0 0.0
    %378 = vmatprep.subr.mxu0 0.0
    %379 = vmatpush1.msra.mxu0 0.0
    %380 = vmatprep.subr.mxu0 0.0
    %381 = vmatpush1.msra.mxu0 0.0
    %382 = vmatprep.subr.mxu0 0.0
    %383 = vmatpush1.msra.mxu0 0.0
    %384 = vmatprep.subr.mxu0 0.0
    %385 = vmatpush1.msra.mxu0 0.0
    %386 = vmatprep.subr.mxu0 0.0
    %387 = vmatpush1.msra.mxu0 0.0
    %388 = vmatprep.subr.mxu0 0.0
    %389 = vmatpush1.msra.mxu0 0.0
    %390 = vmatprep.subr.mxu0 0.0
    %391 = vmatpush1.msra.mxu0 0.0
    %392 = vmatprep.subr.mxu0 0.0
    %393 = vmatpush1.msra.mxu0 0.0
    %394 = vmatprep.subr.mxu0 0.0
    %395 = vmatpush1.msra.mxu0 0.0
    %396 = vmatprep.subr.mxu0 0.0
    %397 = vmatpush1.msra.mxu0 0.0
    %398 = vmatprep.subr.mxu0 0.0
    %399 = vmatpush1.msra.mxu0 0.0
    %400 = vmatprep.subr.mxu0 0.0
    %401 = vmatpush1.msra.mxu0 0.0
    %402 = vmatprep.subr.mxu0 0.0
    %403 = vmatpush1.msra.mxu0 0.0
    %404 = vmatprep.mubr.f32.mxu0 0.0
    %405 = vmatmul.mubr.f32.gmra.mrb[0].mxu0 %v338
    %v406 = vpop.f32.mrb[0].mxu0
    %v407 = vadd.f32 0.0, %v406
    %v408 = vpop.f32.mrb[0].mxu0
    %409 = vdwg.mxu0
    %410 = vrot.lane.b32.xlu0 %v154, 64
    %v411 = vpop.permute.xlu0 %410
    %v414 = vsel %vm160, %v333, 0
    %416 = vmatprep.subr.mxu0 0.0
    %417 = vmatpush1.msra.mxu0 %v411
    %418 = vmatprep.subr.mxu0 0.0
    %419 = vmatpush1.msra.mxu0 0.0
    %420 = vmatprep.subr.mxu0 0.0
    %421 = vmatpush1.msra.mxu0 0.0
    %422 = vmatprep.subr.mxu0 0.0
    %423 = vmatpush1.msra.mxu0 0.0
    %424 = vmatprep.subr.mxu0 0.0
    %425 = vmatpush1.msra.mxu0 0.0
    %426 = vmatprep.subr.mxu0 0.0
    %427 = vmatpush1.msra.mxu0 0.0
    %428 = vmatprep.subr.mxu0 0.0
    %429 = vmatpush1.msra.mxu0 0.0
    %430 = vmatprep.subr.mxu0 0.0
    %431 = vmatpush1.msra.mxu0 0.0
    %432 = vmatprep.subr.mxu0 0.0
    %433 = vmatpush1.msra.mxu0 0.0
    %434 = vmatprep.subr.mxu0 0.0
    %435 = vmatpush1.msra.mxu0 0.0
    %436 = vmatprep.subr.mxu0 0.0
    %437 = vmatpush1.msra.mxu0 0.0
    %438 = vmatprep.subr.mxu0 0.0
    %439 = vmatpush1.msra.mxu0 0.0
    %440 = vmatprep.subr.mxu0 0.0
    %441 = vmatpush1.msra.mxu0 0.0
    %442 = vmatprep.subr.mxu0 0.0
    %443 = vmatpush1.msra.mxu0 0.0
    %444 = vmatprep.subr.mxu0 0.0
    %445 = vmatpush1.msra.mxu0 0.0
    %446 = vmatprep.subr.mxu0 0.0
    %447 = vmatpush1.msra.mxu0 0.0
    %448 = vmatprep.subr.mxu0 0.0
    %449 = vmatpush1.msra.mxu0 0.0
    %450 = vmatprep.subr.mxu0 0.0
    %451 = vmatpush1.msra.mxu0 0.0
    %452 = vmatprep.subr.mxu0 0.0
    %453 = vmatpush1.msra.mxu0 0.0
    %454 = vmatprep.subr.mxu0 0.0
    %455 = vmatpush1.msra.mxu0 0.0
    %456 = vmatprep.subr.mxu0 0.0
    %457 = vmatpush1.msra.mxu0 0.0
    %458 = vmatprep.subr.mxu0 0.0
    %459 = vmatpush1.msra.mxu0 0.0
    %460 = vmatprep.subr.mxu0 0.0
    %461 = vmatpush1.msra.mxu0 0.0
    %462 = vmatprep.subr.mxu0 0.0
    %463 = vmatpush1.msra.mxu0 0.0
    %464 = vmatprep.subr.mxu0 0.0
    %465 = vmatpush1.msra.mxu0 0.0
    %466 = vmatprep.subr.mxu0 0.0
    %467 = vmatpush1.msra.mxu0 0.0
    %468 = vmatprep.subr.mxu0 0.0
    %469 = vmatpush1.msra.mxu0 0.0
    %470 = vmatprep.subr.mxu0 0.0
    %471 = vmatpush1.msra.mxu0 0.0
    %472 = vmatprep.subr.mxu0 0.0
    %473 = vmatpush1.msra.mxu0 0.0
    %474 = vmatprep.subr.mxu0 0.0
    %475 = vmatpush1.msra.mxu0 0.0
    %476 = vmatprep.subr.mxu0 0.0
    %477 = vmatpush1.msra.mxu0 0.0
    %478 = vmatprep.subr.mxu0 0.0
    %479 = vmatpush1.msra.mxu0 0.0
    %480 = vmatprep.mubr.f32.mxu0 0.0
    %481 = vmatmul.mubr.f32.gmra.mrb[0].mxu0 %v414
    %v482 = vpop.f32.mrb[0].mxu0
    %v483 = vadd.f32 0.0, %v482
    %v484 = vpop.f32.mrb[0].mxu0
    %485 = vdwg.mxu0
    %486 = vrot.lane.b32.xlu0 %v149, 120
    %v487 = vpop.permute.xlu0 %486
    %488 = vrot.lane.b32.xlu0 %v149, 88
    %v489 = vpop.permute.xlu0 %488
    %v490 = vsel %vm160, %v487, 0
    %v492 = vsel %vm160, %v489, 0
    %494 = vmatprep.subr.mxu0 0.0
    %495 = vmatpush1.xpose.msra.mxu0 %v492
    %496 = vmatprep.subr.mxu0 0.0
    %497 = vmatpush1.xpose.msra.mxu0 0.0
    %498 = vmatprep.subr.mxu0 0.0
    %499 = vmatpush1.xpose.msra.mxu0 0.0
    %500 = vmatprep.subr.mxu0 0.0
    %501 = vmatpush1.xpose.msra.mxu0 0.0
    %502 = vmatprep.subr.mxu0 0.0
    %503 = vmatpush1.xpose.msra.mxu0 0.0
    %504 = vmatprep.subr.mxu0 0.0
    %505 = vmatpush1.xpose.msra.mxu0 0.0
    %506 = vmatprep.subr.mxu0 0.0
    %507 = vmatpush1.xpose.msra.mxu0 0.0
    %508 = vmatprep.subr.mxu0 0.0
    %509 = vmatpush1.xpose.msra.mxu0 0.0
    %510 = vmatprep.subr.mxu0 0.0
    %511 = vmatpush1.xpose.msra.mxu0 0.0
    %512 = vmatprep.subr.mxu0 0.0
    %513 = vmatpush1.xpose.msra.mxu0 0.0
    %514 = vmatprep.subr.mxu0 0.0
    %515 = vmatpush1.xpose.msra.mxu0 0.0
    %516 = vmatprep.subr.mxu0 0.0
    %517 = vmatpush1.xpose.msra.mxu0 0.0
    %518 = vmatprep.subr.mxu0 0.0
    %519 = vmatpush1.xpose.msra.mxu0 0.0
    %520 = vmatprep.subr.mxu0 0.0
    %521 = vmatpush1.xpose.msra.mxu0 0.0
    %522 = vmatprep.subr.mxu0 0.0
    %523 = vmatpush1.xpose.msra.mxu0 0.0
    %524 = vmatprep.subr.mxu0 0.0
    %525 = vmatpush1.xpose.msra.mxu0 0.0
    %526 = vmatprep.subr.mxu0 0.0
    %527 = vmatpush1.xpose.msra.mxu0 0.0
    %528 = vmatprep.subr.mxu0 0.0
    %529 = vmatpush1.xpose.msra.mxu0 0.0
    %530 = vmatprep.subr.mxu0 0.0
    %531 = vmatpush1.xpose.msra.mxu0 0.0
    %532 = vmatprep.subr.mxu0 0.0
    %533 = vmatpush1.xpose.msra.mxu0 0.0
    %534 = vmatprep.subr.mxu0 0.0
    %535 = vmatpush1.xpose.msra.mxu0 0.0
    %536 = vmatprep.subr.mxu0 0.0
    %537 = vmatpush1.xpose.msra.mxu0 0.0
    %538 = vmatprep.subr.mxu0 0.0
    %539 = vmatpush1.xpose.msra.mxu0 0.0
    %540 = vmatprep.subr.mxu0 0.0
    %541 = vmatpush1.xpose.msra.mxu0 0.0
    %542 = vmatprep.subr.mxu0 0.0
    %543 = vmatpush1.xpose.msra.mxu0 0.0
    %544 = vmatprep.subr.mxu0 0.0
    %545 = vmatpush1.xpose.msra.mxu0 0.0
    %546 = vmatprep.subr.mxu0 0.0
    %547 = vmatpush1.xpose.msra.mxu0 0.0
    %548 = vmatprep.subr.mxu0 0.0
    %549 = vmatpush1.xpose.msra.mxu0 0.0
    %550 = vmatprep.subr.mxu0 0.0
    %551 = vmatpush1.xpose.msra.mxu0 0.0
    %552 = vmatprep.subr.mxu0 0.0
    %553 = vmatpush1.xpose.msra.mxu0 0.0
    %554 = vmatprep.subr.mxu0 0.0
    %555 = vmatpush1.xpose.msra.mxu0 0.0
    %556 = vmatprep.subr.mxu0 0.0
    %557 = vmatpush1.xpose.msra.mxu0 0.0
    %558 = vmatprep.mubr.f32.mxu0 0.0
    %559 = vmatmul.mubr.f32.gmra.mrb[0].mxu0 %v490
    %v560 = vpop.f32.mrb[0].mxu0
    %v561 = vadd.f32 0.0, %v560
    %v562 = vpop.f32.mrb[0].mxu0
    %563 = vdwg.mxu0
    %564 = vrot.lane.b32.xlu0 %v154, 120
    %v565 = vpop.permute.xlu0 %564
    %566 = vrot.lane.b32.xlu0 %v154, 88
    %v567 = vpop.permute.xlu0 %566
    %v568 = vsel %vm160, %v565, 0
    %v570 = vsel %vm160, %v567, 0
    %572 = vmatprep.subr.mxu0 0.0
    %573 = vmatpush1.xpose.msra.mxu0 %v570
    %574 = vmatprep.subr.mxu0 0.0
    %575 = vmatpush1.xpose.msra.mxu0 0.0
    %576 = vmatprep.subr.mxu0 0.0
    %577 = vmatpush1.xpose.msra.mxu0 0.0
    %578 = vmatprep.subr.mxu0 0.0
    %579 = vmatpush1.xpose.msra.mxu0 0.0
    %580 = vmatprep.subr.mxu0 0.0
    %581 = vmatpush1.xpose.msra.mxu0 0.0
    %582 = vmatprep.subr.mxu0 0.0
    %583 = vmatpush1.xpose.msra.mxu0 0.0
    %584 = vmatprep.subr.mxu0 0.0
    %585 = vmatpush1.xpose.msra.mxu0 0.0
    %586 = vmatprep.subr.mxu0 0.0
    %587 = vmatpush1.xpose.msra.mxu0 0.0
    %588 = vmatprep.subr.mxu0 0.0
    %589 = vmatpush1.xpose.msra.mxu0 0.0
    %590 = vmatprep.subr.mxu0 0.0
    %591 = vmatpush1.xpose.msra.mxu0 0.0
    %592 = vmatprep.subr.mxu0 0.0
    %593 = vmatpush1.xpose.msra.mxu0 0.0
    %594 = vmatprep.subr.mxu0 0.0
    %595 = vmatpush1.xpose.msra.mxu0 0.0
    %596 = vmatprep.subr.mxu0 0.0
    %597 = vmatpush1.xpose.msra.mxu0 0.0
    %598 = vmatprep.subr.mxu0 0.0
    %599 = vmatpush1.xpose.msra.mxu0 0.0
    %600 = vmatprep.subr.mxu0 0.0
    %601 = vmatpush1.xpose.msra.mxu0 0.0
    %602 = vmatprep.subr.mxu0 0.0
    %603 = vmatpush1.xpose.msra.mxu0 0.0
    %604 = vmatprep.subr.mxu0 0.0
    %605 = vmatpush1.xpose.msra.mxu0 0.0
    %606 = vmatprep.subr.mxu0 0.0
    %607 = vmatpush1.xpose.msra.mxu0 0.0
    %608 = vmatprep.subr.mxu0 0.0
    %609 = vmatpush1.xpose.msra.mxu0 0.0
    %610 = vmatprep.subr.mxu0 0.0
    %611 = vmatpush1.xpose.msra.mxu0 0.0
    %612 = vmatprep.subr.mxu0 0.0
    %613 = vmatpush1.xpose.msra.mxu0 0.0
    %614 = vmatprep.subr.mxu0 0.0
    %615 = vmatpush1.xpose.msra.mxu0 0.0
    %616 = vmatprep.subr.mxu0 0.0
    %617 = vmatpush1.xpose.msra.mxu0 0.0
    %618 = vmatprep.subr.mxu0 0.0
    %619 = vmatpush1.xpose.msra.mxu0 0.0
    %620 = vmatprep.subr.mxu0 0.0
    %621 = vmatpush1.xpose.msra.mxu0 0.0
    %622 = vmatprep.subr.mxu0 0.0
    %623 = vmatpush1.xpose.msra.mxu0 0.0
    %624 = vmatprep.subr.mxu0 0.0
    %625 = vmatpush1.xpose.msra.mxu0 0.0
    %626 = vmatprep.subr.mxu0 0.0
    %627 = vmatpush1.xpose.msra.mxu0 0.0
    %628 = vmatprep.subr.mxu0 0.0
    %629 = vmatpush1.xpose.msra.mxu0 0.0
    %630 = vmatprep.subr.mxu0 0.0
    %631 = vmatpush1.xpose.msra.mxu0 0.0
    %632 = vmatprep.subr.mxu0 0.0
    %633 = vmatpush1.xpose.msra.mxu0 0.0
    %634 = vmatprep.subr.mxu0 0.0
    %635 = vmatpush1.xpose.msra.mxu0 0.0
    %636 = vmatprep.mubr.f32.mxu0 0.0
    %637 = vmatmul.mubr.f32.gmra.mrb[0].mxu0 %v568
    %v638 = vpop.f32.mrb[0].mxu0
    %v639 = vadd.f32 0.0, %v638
    %v640 = vpop.f32.mrb[0].mxu0
    %641 = vdwg.mxu0
    %v642 = vsel %vm160, %v561, -inf
    %643 = vmax.xlane.f32.xlu0 %v642
    %v644 = vpop.xlane.xlu0 %643
    %v645 = vsel %vm160, %v639, -inf
    %646 = vmax.xlane.f32.xlu0 %v645
    %v647 = vpop.xlane.xlu0 %646
    %v648 = vsub.f32 %v561, %v644
    %v649 = vsub.f32 %v639, %v647
    %v650 = vmul.f32 %v648, 1.442695
    %v651 = vpow.pop %v650
    %v652 = vmul.f32 %v649, 1.442695
    %v653 = vpow.pop %v652
    %v654 = vsel %vm160, %v651, 0.0
    %655 = vadd.xlane.f32.xlu0 %v654
    %v656 = vpop.xlane.xlu0 %655
    %v657 = vsel %vm160, %v653, 0.0
    %658 = vadd.xlane.f32.xlu0 %v657
    %v659 = vpop.xlane.xlu0 %658
    %v660 = vrcp.pop %v656
    %v661 = vrcp.pop %v659
    %v662 = vmul.f32 %v651, %v660
    %v663 = vmul.f32 %v653, %v661
    %664 = vrot.lane.b32.xlu0 %v149, 56
    %v665 = vpop.permute.xlu0 %664
    %v668 = vsel %vm160, %v662, 0
    %670 = vmatprep.subr.mxu0 0.0
    %671 = vmatpush1.msra.mxu0 %v665
    %672 = vmatprep.subr.mxu0 0.0
    %673 = vmatpush1.msra.mxu0 0.0
    %674 = vmatprep.subr.mxu0 0.0
    %675 = vmatpush1.msra.mxu0 0.0
    %676 = vmatprep.subr.mxu0 0.0
    %677 = vmatpush1.msra.mxu0 0.0
    %678 = vmatprep.subr.mxu0 0.0
    %679 = vmatpush1.msra.mxu0 0.0
    %680 = vmatprep.subr.mxu0 0.0
    %681 = vmatpush1.msra.mxu0 0.0
    %682 = vmatprep.subr.mxu0 0.0
    %683 = vmatpush1.msra.mxu0 0.0
    %684 = vmatprep.subr.mxu0 0.0
    %685 = vmatpush1.msra.mxu0 0.0
    %686 = vmatprep.subr.mxu0 0.0
    %687 = vmatpush1.msra.mxu0 0.0
    %688 = vmatprep.subr.mxu0 0.0
    %689 = vmatpush1.msra.mxu0 0.0
    %690 = vmatprep.subr.mxu0 0.0
    %691 = vmatpush1.msra.mxu0 0.0
    %692 = vmatprep.subr.mxu0 0.0
    %693 = vmatpush1.msra.mxu0 0.0
    %694 = vmatprep.subr.mxu0 0.0
    %695 = vmatpush1.msra.mxu0 0.0
    %696 = vmatprep.subr.mxu0 0.0
    %697 = vmatpush1.msra.mxu0 0.0
    %698 = vmatprep.subr.mxu0 0.0
    %699 = vmatpush1.msra.mxu0 0.0
    %700 = vmatprep.subr.mxu0 0.0
    %701 = vmatpush1.msra.mxu0 0.0
    %702 = vmatprep.subr.mxu0 0.0
    %703 = vmatpush1.msra.mxu0 0.0
    %704 = vmatprep.subr.mxu0 0.0
    %705 = vmatpush1.msra.mxu0 0.0
    %706 = vmatprep.subr.mxu0 0.0
    %707 = vmatpush1.msra.mxu0 0.0
    %708 = vmatprep.subr.mxu0 0.0
    %709 = vmatpush1.msra.mxu0 0.0
    %710 = vmatprep.subr.mxu0 0.0
    %711 = vmatpush1.msra.mxu0 0.0
    %712 = vmatprep.subr.mxu0 0.0
    %713 = vmatpush1.msra.mxu0 0.0
    %714 = vmatprep.subr.mxu0 0.0
    %715 = vmatpush1.msra.mxu0 0.0
    %716 = vmatprep.subr.mxu0 0.0
    %717 = vmatpush1.msra.mxu0 0.0
    %718 = vmatprep.subr.mxu0 0.0
    %719 = vmatpush1.msra.mxu0 0.0
    %720 = vmatprep.subr.mxu0 0.0
    %721 = vmatpush1.msra.mxu0 0.0
    %722 = vmatprep.subr.mxu0 0.0
    %723 = vmatpush1.msra.mxu0 0.0
    %724 = vmatprep.subr.mxu0 0.0
    %725 = vmatpush1.msra.mxu0 0.0
    %726 = vmatprep.subr.mxu0 0.0
    %727 = vmatpush1.msra.mxu0 0.0
    %728 = vmatprep.subr.mxu0 0.0
    %729 = vmatpush1.msra.mxu0 0.0
    %730 = vmatprep.subr.mxu0 0.0
    %731 = vmatpush1.msra.mxu0 0.0
    %732 = vmatprep.subr.mxu0 0.0
    %733 = vmatpush1.msra.mxu0 0.0
    %734 = vmatprep.mubr.f32.mxu0 0.0
    %735 = vmatmul.mubr.f32.gmra.mrb[0].mxu0 %v668
    %v736 = vpop.f32.mrb[0].mxu0
    %v737 = vadd.f32 0.0, %v736
    %v738 = vpop.f32.mrb[0].mxu0
    %739 = vdwg.mxu0
    %740 = vrot.lane.b32.xlu0 %v154, 56
    %v741 = vpop.permute.xlu0 %740
    %v744 = vsel %vm160, %v663, 0
    %746 = vmatprep.subr.mxu0 0.0
    %747 = vmatpush1.msra.mxu0 %v741
    %748 = vmatprep.subr.mxu0 0.0
    %749 = vmatpush1.msra.mxu0 0.0
    %750 = vmatprep.subr.mxu0 0.0
    %751 = vmatpush1.msra.mxu0 0.0
    %752 = vmatprep.subr.mxu0 0.0
    %753 = vmatpush1.msra.mxu0 0.0
    %754 = vmatprep.subr.mxu0 0.0
    %755 = vmatpush1.msra.mxu0 0.0
    %756 = vmatprep.subr.mxu0 0.0
    %757 = vmatpush1.msra.mxu0 0.0
    %758 = vmatprep.subr.mxu0 0.0
    %759 = vmatpush1.msra.mxu0 0.0
    %760 = vmatprep.subr.mxu0 0.0
    %761 = vmatpush1.msra.mxu0 0.0
    %762 = vmatprep.subr.mxu0 0.0
    %763 = vmatpush1.msra.mxu0 0.0
    %764 = vmatprep.subr.mxu0 0.0
    %765 = vmatpush1.msra.mxu0 0.0
    %766 = vmatprep.subr.mxu0 0.0
    %767 = vmatpush1.msra.mxu0 0.0
    %768 = vmatprep.subr.mxu0 0.0
    %769 = vmatpush1.msra.mxu0 0.0
    %770 = vmatprep.subr.mxu0 0.0
    %771 = vmatpush1.msra.mxu0 0.0
    %772 = vmatprep.subr.mxu0 0.0
    %773 = vmatpush1.msra.mxu0 0.0
    %774 = vmatprep.subr.mxu0 0.0
    %775 = vmatpush1.msra.mxu0 0.0
    %776 = vmatprep.subr.mxu0 0.0
    %777 = vmatpush1.msra.mxu0 0.0
    %778 = vmatprep.subr.mxu0 0.0
    %779 = vmatpush1.msra.mxu0 0.0
    %780 = vmatprep.subr.mxu0 0.0
    %781 = vmatpush1.msra.mxu0 0.0
    %782 = vmatprep.subr.mxu0 0.0
    %783 = vmatpush1.msra.mxu0 0.0
    %784 = vmatprep.subr.mxu0 0.0
    %785 = vmatpush1.msra.mxu0 0.0
    %786 = vmatprep.subr.mxu0 0.0
    %787 = vmatpush1.msra.mxu0 0.0
    %788 = vmatprep.subr.mxu0 0.0
    %789 = vmatpush1.msra.mxu0 0.0
    %790 = vmatprep.subr.mxu0 0.0
    %791 = vmatpush1.msra.mxu0 0.0
    %792 = vmatprep.subr.mxu0 0.0
    %793 = vmatpush1.msra.mxu0 0.0
    %794 = vmatprep.subr.mxu0 0.0
    %795 = vmatpush1.msra.mxu0 0.0
    %796 = vmatprep.subr.mxu0 0.0
    %797 = vmatpush1.msra.mxu0 0.0
    %798 = vmatprep.subr.mxu0 0.0
    %799 = vmatpush1.msra.mxu0 0.0
    %800 = vmatprep.subr.mxu0 0.0
    %801 = vmatpush1.msra.mxu0 0.0
    %802 = vmatprep.subr.mxu0 0.0
    %803 = vmatpush1.msra.mxu0 0.0
    %804 = vmatprep.subr.mxu0 0.0
    %805 = vmatpush1.msra.mxu0 0.0
    %806 = vmatprep.subr.mxu0 0.0
    %807 = vmatpush1.msra.mxu0 0.0
    %808 = vmatprep.subr.mxu0 0.0
    %809 = vmatpush1.msra.mxu0 0.0
    %810 = vmatprep.mubr.f32.mxu0 0.0
    %811 = vmatmul.mubr.f32.gmra.mrb[0].mxu0 %v744
    %v812 = vpop.f32.mrb[0].mxu0
    %v813 = vadd.f32 0.0, %v812
    %v814 = vpop.f32.mrb[0].mxu0
    %815 = vdwg.mxu0
    %816 = vrot.lane.b32.xlu0 %v149, 112
    %v817 = vpop.permute.xlu0 %816
    %818 = vrot.lane.b32.xlu0 %v149, 80
    %v819 = vpop.permute.xlu0 %818
    %v820 = vsel %vm160, %v817, 0
    %v822 = vsel %vm160, %v819, 0
    %824 = vmatprep.subr.mxu0 0.0
    %825 = vmatpush1.xpose.msra.mxu0 %v822
    %826 = vmatprep.subr.mxu0 0.0
    %827 = vmatpush1.xpose.msra.mxu0 0.0
    %828 = vmatprep.subr.mxu0 0.0
    %829 = vmatpush1.xpose.msra.mxu0 0.0
    %830 = vmatprep.subr.mxu0 0.0
    %831 = vmatpush1.xpose.msra.mxu0 0.0
    %832 = vmatprep.subr.mxu0 0.0
    %833 = vmatpush1.xpose.msra.mxu0 0.0
    %834 = vmatprep.subr.mxu0 0.0
    %835 = vmatpush1.xpose.msra.mxu0 0.0
    %836 = vmatprep.subr.mxu0 0.0
    %837 = vmatpush1.xpose.msra.mxu0 0.0
    %838 = vmatprep.subr.mxu0 0.0
    %839 = vmatpush1.xpose.msra.mxu0 0.0
    %840 = vmatprep.subr.mxu0 0.0
    %841 = vmatpush1.xpose.msra.mxu0 0.0
    %842 = vmatprep.subr.mxu0 0.0
    %843 = vmatpush1.xpose.msra.mxu0 0.0
    %844 = vmatprep.subr.mxu0 0.0
    %845 = vmatpush1.xpose.msra.mxu0 0.0
    %846 = vmatprep.subr.mxu0 0.0
    %847 = vmatpush1.xpose.msra.mxu0 0.0
    %848 = vmatprep.subr.mxu0 0.0
    %849 = vmatpush1.xpose.msra.mxu0 0.0
    %850 = vmatprep.subr.mxu0 0.0
    %851 = vmatpush1.xpose.msra.mxu0 0.0
    %852 = vmatprep.subr.mxu0 0.0
    %853 = vmatpush1.xpose.msra.mxu0 0.0
    %854 = vmatprep.subr.mxu0 0.0
    %855 = vmatpush1.xpose.msra.mxu0 0.0
    %856 = vmatprep.subr.mxu0 0.0
    %857 = vmatpush1.xpose.msra.mxu0 0.0
    %858 = vmatprep.subr.mxu0 0.0
    %859 = vmatpush1.xpose.msra.mxu0 0.0
    %860 = vmatprep.subr.mxu0 0.0
    %861 = vmatpush1.xpose.msra.mxu0 0.0
    %862 = vmatprep.subr.mxu0 0.0
    %863 = vmatpush1.xpose.msra.mxu0 0.0
    %864 = vmatprep.subr.mxu0 0.0
    %865 = vmatpush1.xpose.msra.mxu0 0.0
    %866 = vmatprep.subr.mxu0 0.0
    %867 = vmatpush1.xpose.msra.mxu0 0.0
    %868 = vmatprep.subr.mxu0 0.0
    %869 = vmatpush1.xpose.msra.mxu0 0.0
    %870 = vmatprep.subr.mxu0 0.0
    %871 = vmatpush1.xpose.msra.mxu0 0.0
    %872 = vmatprep.subr.mxu0 0.0
    %873 = vmatpush1.xpose.msra.mxu0 0.0
    %874 = vmatprep.subr.mxu0 0.0
    %875 = vmatpush1.xpose.msra.mxu0 0.0
    %876 = vmatprep.subr.mxu0 0.0
    %877 = vmatpush1.xpose.msra.mxu0 0.0
    %878 = vmatprep.subr.mxu0 0.0
    %879 = vmatpush1.xpose.msra.mxu0 0.0
    %880 = vmatprep.subr.mxu0 0.0
    %881 = vmatpush1.xpose.msra.mxu0 0.0
    %882 = vmatprep.subr.mxu0 0.0
    %883 = vmatpush1.xpose.msra.mxu0 0.0
    %884 = vmatprep.subr.mxu0 0.0
    %885 = vmatpush1.xpose.msra.mxu0 0.0
    %886 = vmatprep.subr.mxu0 0.0
    %887 = vmatpush1.xpose.msra.mxu0 0.0
    %888 = vmatprep.mubr.f32.mxu0 0.0
    %889 = vmatmul.mubr.f32.gmra.mrb[0].mxu0 %v820
    %v890 = vpop.f32.mrb[0].mxu0
    %v891 = vadd.f32 0.0, %v890
    %v892 = vpop.f32.mrb[0].mxu0
    %893 = vdwg.mxu0
    %894 = vrot.lane.b32.xlu0 %v154, 112
    %v895 = vpop.permute.xlu0 %894
    %896 = vrot.lane.b32.xlu0 %v154, 80
    %v897 = vpop.permute.xlu0 %896
    %v898 = vsel %vm160, %v895, 0
    %v900 = vsel %vm160, %v897, 0
    %902 = vmatprep.subr.mxu0 0.0
    %903 = vmatpush1.xpose.msra.mxu0 %v900
    %904 = vmatprep.subr.mxu0 0.0
    %905 = vmatpush1.xpose.msra.mxu0 0.0
    %906 = vmatprep.subr.mxu0 0.0
    %907 = vmatpush1.xpose.msra.mxu0 0.0
    %908 = vmatprep.subr.mxu0 0.0
    %909 = vmatpush1.xpose.msra.mxu0 0.0
    %910 = vmatprep.subr.mxu0 0.0
    %911 = vmatpush1.xpose.msra.mxu0 0.0
    %912 = vmatprep.subr.mxu0 0.0
    %913 = vmatpush1.xpose.msra.mxu0 0.0
    %914 = vmatprep.subr.mxu0 0.0
    %915 = vmatpush1.xpose.msra.mxu0 0.0
    %916 = vmatprep.subr.mxu0 0.0
    %917 = vmatpush1.xpose.msra.mxu0 0.0
    %918 = vmatprep.subr.mxu0 0.0
    %919 = vmatpush1.xpose.msra.mxu0 0.0
    %920 = vmatprep.subr.mxu0 0.0
    %921 = vmatpush1.xpose.msra.mxu0 0.0
    %922 = vmatprep.subr.mxu0 0.0
    %923 = vmatpush1.xpose.msra.mxu0 0.0
    %924 = vmatprep.subr.mxu0 0.0
    %925 = vmatpush1.xpose.msra.mxu0 0.0
    %926 = vmatprep.subr.mxu0 0.0
    %927 = vmatpush1.xpose.msra.mxu0 0.0
    %928 = vmatprep.subr.mxu0 0.0
    %929 = vmatpush1.xpose.msra.mxu0 0.0
    %930 = vmatprep.subr.mxu0 0.0
    %931 = vmatpush1.xpose.msra.mxu0 0.0
    %932 = vmatprep.subr.mxu0 0.0
    %933 = vmatpush1.xpose.msra.mxu0 0.0
    %934 = vmatprep.subr.mxu0 0.0
    %935 = vmatpush1.xpose.msra.mxu0 0.0
    %936 = vmatprep.subr.mxu0 0.0
    %937 = vmatpush1.xpose.msra.mxu0 0.0
    %938 = vmatprep.subr.mxu0 0.0
    %939 = vmatpush1.xpose.msra.mxu0 0.0
    %940 = vmatprep.subr.mxu0 0.0
    %941 = vmatpush1.xpose.msra.mxu0 0.0
    %942 = vmatprep.subr.mxu0 0.0
    %943 = vmatpush1.xpose.msra.mxu0 0.0
    %944 = vmatprep.subr.mxu0 0.0
    %945 = vmatpush1.xpose.msra.mxu0 0.0
    %946 = vmatprep.subr.mxu0 0.0
    %947 = vmatpush1.xpose.msra.mxu0 0.0
    %948 = vmatprep.subr.mxu0 0.0
    %949 = vmatpush1.xpose.msra.mxu0 0.0
    %950 = vmatprep.subr.mxu0 0.0
    %951 = vmatpush1.xpose.msra.mxu0 0.0
    %952 = vmatprep.subr.mxu0 0.0
    %953 = vmatpush1.xpose.msra.mxu0 0.0
    %954 = vmatprep.subr.mxu0 0.0
    %955 = vmatpush1.xpose.msra.mxu0 0.0
    %956 = vmatprep.subr.mxu0 0.0
    %957 = vmatpush1.xpose.msra.mxu0 0.0
    %958 = vmatprep.subr.mxu0 0.0
    %959 = vmatpush1.xpose.msra.mxu0 0.0
    %960 = vmatprep.subr.mxu0 0.0
    %961 = vmatpush1.xpose.msra.mxu0 0.0
    %962 = vmatprep.subr.mxu0 0.0
    %963 = vmatpush1.xpose.msra.mxu0 0.0
    %964 = vmatprep.subr.mxu0 0.0
    %965 = vmatpush1.xpose.msra.mxu0 0.0
    %966 = vmatprep.mubr.f32.mxu0 0.0
    %967 = vmatmul.mubr.f32.gmra.mrb[0].mxu0 %v898
    %v968 = vpop.f32.mrb[0].mxu0
    %v969 = vadd.f32 0.0, %v968
    %v970 = vpop.f32.mrb[0].mxu0
    %971 = vdwg.mxu0
    %v972 = vsel %vm160, %v891, -inf
    %973 = vmax.xlane.f32.xlu0 %v972
    %v974 = vpop.xlane.xlu0 %973
    %v975 = vsel %vm160, %v969, -inf
    %976 = vmax.xlane.f32.xlu0 %v975
    %v977 = vpop.xlane.xlu0 %976
    %v978 = vsub.f32 %v891, %v974
    %v979 = vsub.f32 %v969, %v977
    %v980 = vmul.f32 %v978, 1.442695
    %v981 = vpow.pop %v980
    %v982 = vmul.f32 %v979, 1.442695
    %v983 = vpow.pop %v982
    %v984 = vsel %vm160, %v981, 0.0
    %985 = vadd.xlane.f32.xlu0 %v984
    %v986 = vpop.xlane.xlu0 %985
    %v987 = vsel %vm160, %v983, 0.0
    %988 = vadd.xlane.f32.xlu0 %v987
    %v989 = vpop.xlane.xlu0 %988
    %v990 = vrcp.pop %v986
    %v991 = vrcp.pop %v989
    %v992 = vmul.f32 %v981, %v990
    %v993 = vmul.f32 %v983, %v991
    %994 = vrot.lane.b32.xlu0 %v149, 48
    %v995 = vpop.permute.xlu0 %994
    %v998 = vsel %vm160, %v992, 0
    %1000 = vmatprep.subr.mxu0 0.0
    %1001 = vmatpush1.msra.mxu0 %v995
    %1002 = vmatprep.subr.mxu0 0.0
    %1003 = vmatpush1.msra.mxu0 0.0
    %1004 = vmatprep.subr.mxu0 0.0
    %1005 = vmatpush1.msra.mxu0 0.0
    %1006 = vmatprep.subr.mxu0 0.0
    %1007 = vmatpush1.msra.mxu0 0.0
    %1008 = vmatprep.subr.mxu0 0.0
    %1009 = vmatpush1.msra.mxu0 0.0
    %1010 = vmatprep.subr.mxu0 0.0
    %1011 = vmatpush1.msra.mxu0 0.0
    %1012 = vmatprep.subr.mxu0 0.0
    %1013 = vmatpush1.msra.mxu0 0.0
    %1014 = vmatprep.subr.mxu0 0.0
    %1015 = vmatpush1.msra.mxu0 0.0
    %1016 = vmatprep.subr.mxu0 0.0
    %1017 = vmatpush1.msra.mxu0 0.0
    %1018 = vmatprep.subr.mxu0 0.0
    %1019 = vmatpush1.msra.mxu0 0.0
    %1020 = vmatprep.subr.mxu0 0.0
    %1021 = vmatpush1.msra.mxu0 0.0
    %1022 = vmatprep.subr.mxu0 0.0
    %1023 = vmatpush1.msra.mxu0 0.0
    %1024 = vmatprep.subr.mxu0 0.0
    %1025 = vmatpush1.msra.mxu0 0.0
    %1026 = vmatprep.subr.mxu0 0.0
    %1027 = vmatpush1.msra.mxu0 0.0
    %1028 = vmatprep.subr.mxu0 0.0
    %1029 = vmatpush1.msra.mxu0 0.0
    %1030 = vmatprep.subr.mxu0 0.0
    %1031 = vmatpush1.msra.mxu0 0.0
    %1032 = vmatprep.subr.mxu0 0.0
    %1033 = vmatpush1.msra.mxu0 0.0
    %1034 = vmatprep.subr.mxu0 0.0
    %1035 = vmatpush1.msra.mxu0 0.0
    %1036 = vmatprep.subr.mxu0 0.0
    %1037 = vmatpush1.msra.mxu0 0.0
    %1038 = vmatprep.subr.mxu0 0.0
    %1039 = vmatpush1.msra.mxu0 0.0
    %1040 = vmatprep.subr.mxu0 0.0
    %1041 = vmatpush1.msra.mxu0 0.0
    %1042 = vmatprep.subr.mxu0 0.0
    %1043 = vmatpush1.msra.mxu0 0.0
    %1044 = vmatprep.subr.mxu0 0.0
    %1045 = vmatpush1.msra.mxu0 0.0
    %1046 = vmatprep.subr.mxu0 0.0
    %1047 = vmatpush1.msra.mxu0 0.0
    %1048 = vmatprep.subr.mxu0 0.0
    %1049 = vmatpush1.msra.mxu0 0.0
    %1050 = vmatprep.subr.mxu0 0.0
    %1051 = vmatpush1.msra.mxu0 0.0
    %1052 = vmatprep.subr.mxu0 0.0
    %1053 = vmatpush1.msra.mxu0 0.0
    %1054 = vmatprep.subr.mxu0 0.0
    %1055 = vmatpush1.msra.mxu0 0.0
    %1056 = vmatprep.subr.mxu0 0.0
    %1057 = vmatpush1.msra.mxu0 0.0
    %1058 = vmatprep.subr.mxu0 0.0
    %1059 = vmatpush1.msra.mxu0 0.0
    %1060 = vmatprep.subr.mxu0 0.0
    %1061 = vmatpush1.msra.mxu0 0.0
    %1062 = vmatprep.subr.mxu0 0.0
    %1063 = vmatpush1.msra.mxu0 0.0
    %1064 = vmatprep.mubr.f32.mxu0 0.0
    %1065 = vmatmul.mubr.f32.gmra.mrb[0].mxu0 %v998
    %v1066 = vpop.f32.mrb[0].mxu0
    %v1067 = vadd.f32 0.0, %v1066
    %v1068 = vpop.f32.mrb[0].mxu0
    %1069 = vdwg.mxu0
    %1070 = vrot.lane.b32.xlu0 %v154, 48
    %v1071 = vpop.permute.xlu0 %1070
    %v1074 = vsel %vm160, %v993, 0
    %1076 = vmatprep.subr.mxu0 0.0
    %1077 = vmatpush1.msra.mxu0 %v1071
    %1078 = vmatprep.subr.mxu0 0.0
    %1079 = vmatpush1.msra.mxu0 0.0
    %1080 = vmatprep.subr.mxu0 0.0
    %1081 = vmatpush1.msra.mxu0 0.0
    %1082 = vmatprep.subr.mxu0 0.0
    %1083 = vmatpush1.msra.mxu0 0.0
    %1084 = vmatprep.subr.mxu0 0.0
    %1085 = vmatpush1.msra.mxu0 0.0
    %1086 = vmatprep.subr.mxu0 0.0
    %1087 = vmatpush1.msra.mxu0 0.0
    %1088 = vmatprep.subr.mxu0 0.0
    %1089 = vmatpush1.msra.mxu0 0.0
    %1090 = vmatprep.subr.mxu0 0.0
    %1091 = vmatpush1.msra.mxu0 0.0
    %1092 = vmatprep.subr.mxu0 0.0
    %1093 = vmatpush1.msra.mxu0 0.0
    %1094 = vmatprep.subr.mxu0 0.0
    %1095 = vmatpush1.msra.mxu0 0.0
    %1096 = vmatprep.subr.mxu0 0.0
    %1097 = vmatpush1.msra.mxu0 0.0
    %1098 = vmatprep.subr.mxu0 0.0
    %1099 = vmatpush1.msra.mxu0 0.0
    %1100 = vmatprep.subr.mxu0 0.0
    %1101 = vmatpush1.msra.mxu0 0.0
    %1102 = vmatprep.subr.mxu0 0.0
    %1103 = vmatpush1.msra.mxu0 0.0
    %1104 = vmatprep.subr.mxu0 0.0
    %1105 = vmatpush1.msra.mxu0 0.0
    %1106 = vmatprep.subr.mxu0 0.0
    %1107 = vmatpush1.msra.mxu0 0.0
    %1108 = vmatprep.subr.mxu0 0.0
    %1109 = vmatpush1.msra.mxu0 0.0
    %1110 = vmatprep.subr.mxu0 0.0
    %1111 = vmatpush1.msra.mxu0 0.0
    %1112 = vmatprep.subr.mxu0 0.0
    %1113 = vmatpush1.msra.mxu0 0.0
    %1114 = vmatprep.subr.mxu0 0.0
    %1115 = vmatpush1.msra.mxu0 0.0
    %1116 = vmatprep.subr.mxu0 0.0
    %1117 = vmatpush1.msra.mxu0 0.0
    %1118 = vmatprep.subr.mxu0 0.0
    %1119 = vmatpush1.msra.mxu0 0.0
    %1120 = vmatprep.subr.mxu0 0.0
    %1121 = vmatpush1.msra.mxu0 0.0
    %1122 = vmatprep.subr.mxu0 0.0
    %1123 = vmatpush1.msra.mxu0 0.0
    %1124 = vmatprep.subr.mxu0 0.0
    %1125 = vmatpush1.msra.mxu0 0.0
    %1126 = vmatprep.subr.mxu0 0.0
    %1127 = vmatpush1.msra.mxu0 0.0
    %1128 = vmatprep.subr.mxu0 0.0
    %1129 = vmatpush1.msra.mxu0 0.0
    %1130 = vmatprep.subr.mxu0 0.0
    %1131 = vmatpush1.msra.mxu0 0.0
    %1132 = vmatprep.subr.mxu0 0.0
    %1133 = vmatpush1.msra.mxu0 0.0
    %1134 = vmatprep.subr.mxu0 0.0
    %1135 = vmatpush1.msra.mxu0 0.0
    %1136 = vmatprep.subr.mxu0 0.0
    %1137 = vmatpush1.msra.mxu0 0.0
    %1138 = vmatprep.subr.mxu0 0.0
    %1139 = vmatpush1.msra.mxu0 0.0
    %1140 = vmatprep.mubr.f32.mxu0 0.0
    %1141 = vmatmul.mubr.f32.gmra.mrb[0].mxu0 %v1074
    %v1142 = vpop.f32.mrb[0].mxu0
    %v1143 = vadd.f32 0.0, %v1142
    %v1144 = vpop.f32.mrb[0].mxu0
    %1145 = vdwg.mxu0
    %1146 = vrot.lane.b32.xlu0 %v149, 104
    %v1147 = vpop.permute.xlu0 %1146
    %1148 = vrot.lane.b32.xlu0 %v149, 72
    %v1149 = vpop.permute.xlu0 %1148
    %v1150 = vsel %vm160, %v1147, 0
    %v1152 = vsel %vm160, %v1149, 0
    %1154 = vmatprep.subr.mxu0 0.0
    %1155 = vmatpush1.xpose.msra.mxu0 %v1152
    %1156 = vmatprep.subr.mxu0 0.0
    %1157 = vmatpush1.xpose.msra.mxu0 0.0
    %1158 = vmatprep.subr.mxu0 0.0
    %1159 = vmatpush1.xpose.msra.mxu0 0.0
    %1160 = vmatprep.subr.mxu0 0.0
    %1161 = vmatpush1.xpose.msra.mxu0 0.0
    %1162 = vmatprep.subr.mxu0 0.0
    %1163 = vmatpush1.xpose.msra.mxu0 0.0
    %1164 = vmatprep.subr.mxu0 0.0
    %1165 = vmatpush1.xpose.msra.mxu0 0.0
    %1166 = vmatprep.subr.mxu0 0.0
    %1167 = vmatpush1.xpose.msra.mxu0 0.0
    %1168 = vmatprep.subr.mxu0 0.0
    %1169 = vmatpush1.xpose.msra.mxu0 0.0
    %1170 = vmatprep.subr.mxu0 0.0
    %1171 = vmatpush1.xpose.msra.mxu0 0.0
    %1172 = vmatprep.subr.mxu0 0.0
    %1173 = vmatpush1.xpose.msra.mxu0 0.0
    %1174 = vmatprep.subr.mxu0 0.0
    %1175 = vmatpush1.xpose.msra.mxu0 0.0
    %1176 = vmatprep.subr.mxu0 0.0
    %1177 = vmatpush1.xpose.msra.mxu0 0.0
    %1178 = vmatprep.subr.mxu0 0.0
    %1179 = vmatpush1.xpose.msra.mxu0 0.0
    %1180 = vmatprep.subr.mxu0 0.0
    %1181 = vmatpush1.xpose.msra.mxu0 0.0
    %1182 = vmatprep.subr.mxu0 0.0
    %1183 = vmatpush1.xpose.msra.mxu0 0.0
    %1184 = vmatprep.subr.mxu0 0.0
    %1185 = vmatpush1.xpose.msra.mxu0 0.0
    %1186 = vmatprep.subr.mxu0 0.0
    %1187 = vmatpush1.xpose.msra.mxu0 0.0
    %1188 = vmatprep.subr.mxu0 0.0
    %1189 = vmatpush1.xpose.msra.mxu0 0.0
    %1190 = vmatprep.subr.mxu0 0.0
    %1191 = vmatpush1.xpose.msra.mxu0 0.0
    %1192 = vmatprep.subr.mxu0 0.0
    %1193 = vmatpush1.xpose.msra.mxu0 0.0
    %1194 = vmatprep.subr.mxu0 0.0
    %1195 = vmatpush1.xpose.msra.mxu0 0.0
    %1196 = vmatprep.subr.mxu0 0.0
    %1197 = vmatpush1.xpose.msra.mxu0 0.0
    %1198 = vmatprep.subr.mxu0 0.0
    %1199 = vmatpush1.xpose.msra.mxu0 0.0
    %1200 = vmatprep.subr.mxu0 0.0
    %1201 = vmatpush1.xpose.msra.mxu0 0.0
    %1202 = vmatprep.subr.mxu0 0.0
    %1203 = vmatpush1.xpose.msra.mxu0 0.0
    %1204 = vmatprep.subr.mxu0 0.0
    %1205 = vmatpush1.xpose.msra.mxu0 0.0
    %1206 = vmatprep.subr.mxu0 0.0
    %1207 = vmatpush1.xpose.msra.mxu0 0.0
    %1208 = vmatprep.subr.mxu0 0.0
    %1209 = vmatpush1.xpose.msra.mxu0 0.0
    %1210 = vmatprep.subr.mxu0 0.0
    %1211 = vmatpush1.xpose.msra.mxu0 0.0
    %1212 = vmatprep.subr.mxu0 0.0
    %1213 = vmatpush1.xpose.msra.mxu0 0.0
    %1214 = vmatprep.subr.mxu0 0.0
    %1215 = vmatpush1.xpose.msra.mxu0 0.0
    %1216 = vmatprep.subr.mxu0 0.0
    %1217 = vmatpush1.xpose.msra.mxu0 0.0
    %1218 = vmatprep.mubr.f32.mxu0 0.0
    %1219 = vmatmul.mubr.f32.gmra.mrb[0].mxu0 %v1150
    %v1220 = vpop.f32.mrb[0].mxu0
    %v1221 = vadd.f32 0.0, %v1220
    %v1222 = vpop.f32.mrb[0].mxu0
    %1223 = vdwg.mxu0
    %1224 = vrot.lane.b32.xlu0 %v154, 104
    %v1225 = vpop.permute.xlu0 %1224
    %1226 = vrot.lane.b32.xlu0 %v154, 72
    %v1227 = vpop.permute.xlu0 %1226
    %v1228 = vsel %vm160, %v1225, 0
    %v1230 = vsel %vm160, %v1227, 0
    %1232 = vmatprep.subr.mxu0 0.0
    %1233 = vmatpush1.xpose.msra.mxu0 %v1230
    %1234 = vmatprep.subr.mxu0 0.0
    %1235 = vmatpush1.xpose.msra.mxu0 0.0
    %1236 = vmatprep.subr.mxu0 0.0
    %1237 = vmatpush1.xpose.msra.mxu0 0.0
    %1238 = vmatprep.subr.mxu0 0.0
    %1239 = vmatpush1.xpose.msra.mxu0 0.0
    %1240 = vmatprep.subr.mxu0 0.0
    %1241 = vmatpush1.xpose.msra.mxu0 0.0
    %1242 = vmatprep.subr.mxu0 0.0
    %1243 = vmatpush1.xpose.msra.mxu0 0.0
    %1244 = vmatprep.subr.mxu0 0.0
    %1245 = vmatpush1.xpose.msra.mxu0 0.0
    %1246 = vmatprep.subr.mxu0 0.0
    %1247 = vmatpush1.xpose.msra.mxu0 0.0
    %1248 = vmatprep.subr.mxu0 0.0
    %1249 = vmatpush1.xpose.msra.mxu0 0.0
    %1250 = vmatprep.subr.mxu0 0.0
    %1251 = vmatpush1.xpose.msra.mxu0 0.0
    %1252 = vmatprep.subr.mxu0 0.0
    %1253 = vmatpush1.xpose.msra.mxu0 0.0
    %1254 = vmatprep.subr.mxu0 0.0
    %1255 = vmatpush1.xpose.msra.mxu0 0.0
    %1256 = vmatprep.subr.mxu0 0.0
    %1257 = vmatpush1.xpose.msra.mxu0 0.0
    %1258 = vmatprep.subr.mxu0 0.0
    %1259 = vmatpush1.xpose.msra.mxu0 0.0
    %1260 = vmatprep.subr.mxu0 0.0
    %1261 = vmatpush1.xpose.msra.mxu0 0.0
    %1262 = vmatprep.subr.mxu0 0.0
    %1263 = vmatpush1.xpose.msra.mxu0 0.0
    %1264 = vmatprep.subr.mxu0 0.0
    %1265 = vmatpush1.xpose.msra.mxu0 0.0
    %1266 = vmatprep.subr.mxu0 0.0
    %1267 = vmatpush1.xpose.msra.mxu0 0.0
    %1268 = vmatprep.subr.mxu0 0.0
    %1269 = vmatpush1.xpose.msra.mxu0 0.0
    %1270 = vmatprep.subr.mxu0 0.0
    %1271 = vmatpush1.xpose.msra.mxu0 0.0
    %1272 = vmatprep.subr.mxu0 0.0
    %1273 = vmatpush1.xpose.msra.mxu0 0.0
    %1274 = vmatprep.subr.mxu0 0.0
    %1275 = vmatpush1.xpose.msra.mxu0 0.0
    %1276 = vmatprep.subr.mxu0 0.0
    %1277 = vmatpush1.xpose.msra.mxu0 0.0
    %1278 = vmatprep.subr.mxu0 0.0
    %1279 = vmatpush1.xpose.msra.mxu0 0.0
    %1280 = vmatprep.subr.mxu0 0.0
    %1281 = vmatpush1.xpose.msra.mxu0 0.0
    %1282 = vmatprep.subr.mxu0 0.0
    %1283 = vmatpush1.xpose.msra.mxu0 0.0
    %1284 = vmatprep.subr.mxu0 0.0
    %1285 = vmatpush1.xpose.msra.mxu0 0.0
    %1286 = vmatprep.subr.mxu0 0.0
    %1287 = vmatpush1.xpose.msra.mxu0 0.0
    %1288 = vmatprep.subr.mxu0 0.0
    %1289 = vmatpush1.xpose.msra.mxu0 0.0
    %1290 = vmatprep.subr.mxu0 0.0
    %1291 = vmatpush1.xpose.msra.mxu0 0.0
    %1292 = vmatprep.subr.mxu0 0.0
    %1293 = vmatpush1.xpose.msra.mxu0 0.0
    %1294 = vmatprep.subr.mxu0 0.0
    %1295 = vmatpush1.xpose.msra.mxu0 0.0
    %1296 = vmatprep.mubr.f32.mxu0 0.0
    %1297 = vmatmul.mubr.f32.gmra.mrb[0].mxu0 %v1228
    %v1298 = vpop.f32.mrb[0].mxu0
    %v1299 = vadd.f32 0.0, %v1298
    %v1300 = vpop.f32.mrb[0].mxu0
    %1301 = vdwg.mxu0
    %v1302 = vsel %vm160, %v1221, -inf
    %1303 = vmax.xlane.f32.xlu0 %v1302
    %v1304 = vpop.xlane.xlu0 %1303
    %v1305 = vsel %vm160, %v1299, -inf
    %1306 = vmax.xlane.f32.xlu0 %v1305
    %v1307 = vpop.xlane.xlu0 %1306
    %v1308 = vsub.f32 %v1221, %v1304
    %v1309 = vsub.f32 %v1299, %v1307
    %v1310 = vmul.f32 %v1308, 1.442695
    %v1311 = vpow.pop %v1310
    %v1312 = vmul.f32 %v1309, 1.442695
    %v1313 = vpow.pop %v1312
    %v1314 = vsel %vm160, %v1311, 0.0
    %1315 = vadd.xlane.f32.xlu0 %v1314
    %v1316 = vpop.xlane.xlu0 %1315
    %v1317 = vsel %vm160, %v1313, 0.0
    %1318 = vadd.xlane.f32.xlu0 %v1317
    %v1319 = vpop.xlane.xlu0 %1318
    %v1320 = vrcp.pop %v1316
    %v1321 = vrcp.pop %v1319
    %v1322 = vmul.f32 %v1311, %v1320
    %v1323 = vmul.f32 %v1313, %v1321
    %1324 = vrot.lane.b32.xlu0 %v149, 40
    %v1325 = vpop.permute.xlu0 %1324
    %v1328 = vsel %vm160, %v1322, 0
    %1330 = vmatprep.subr.mxu0 0.0
    %1331 = vmatpush1.msra.mxu0 %v1325
    %1332 = vmatprep.subr.mxu0 0.0
    %1333 = vmatpush1.msra.mxu0 0.0
    %1334 = vmatprep.subr.mxu0 0.0
    %1335 = vmatpush1.msra.mxu0 0.0
    %1336 = vmatprep.subr.mxu0 0.0
    %1337 = vmatpush1.msra.mxu0 0.0
    %1338 = vmatprep.subr.mxu0 0.0
    %1339 = vmatpush1.msra.mxu0 0.0
    %1340 = vmatprep.subr.mxu0 0.0
    %1341 = vmatpush1.msra.mxu0 0.0
    %1342 = vmatprep.subr.mxu0 0.0
    %1343 = vmatpush1.msra.mxu0 0.0
    %1344 = vmatprep.subr.mxu0 0.0
    %1345 = vmatpush1.msra.mxu0 0.0
    %1346 = vmatprep.subr.mxu0 0.0
    %1347 = vmatpush1.msra.mxu0 0.0
    %1348 = vmatprep.subr.mxu0 0.0
    %1349 = vmatpush1.msra.mxu0 0.0
    %1350 = vmatprep.subr.mxu0 0.0
    %1351 = vmatpush1.msra.mxu0 0.0
    %1352 = vmatprep.subr.mxu0 0.0
    %1353 = vmatpush1.msra.mxu0 0.0
    %1354 = vmatprep.subr.mxu0 0.0
    %1355 = vmatpush1.msra.mxu0 0.0
    %1356 = vmatprep.subr.mxu0 0.0
    %1357 = vmatpush1.msra.mxu0 0.0
    %1358 = vmatprep.subr.mxu0 0.0
    %1359 = vmatpush1.msra.mxu0 0.0
    %1360 = vmatprep.subr.mxu0 0.0
    %1361 = vmatpush1.msra.mxu0 0.0
    %1362 = vmatprep.subr.mxu0 0.0
    %1363 = vmatpush1.msra.mxu0 0.0
    %1364 = vmatprep.subr.mxu0 0.0
    %1365 = vmatpush1.msra.mxu0 0.0
    %1366 = vmatprep.subr.mxu0 0.0
    %1367 = vmatpush1.msra.mxu0 0.0
    %1368 = vmatprep.subr.mxu0 0.0
    %1369 = vmatpush1.msra.mxu0 0.0
    %1370 = vmatprep.subr.mxu0 0.0
    %1371 = vmatpush1.msra.mxu0 0.0
    %1372 = vmatprep.subr.mxu0 0.0
    %1373 = vmatpush1.msra.mxu0 0.0
    %1374 = vmatprep.subr.mxu0 0.0
    %1375 = vmatpush1.msra.mxu0 0.0
    %1376 = vmatprep.subr.mxu0 0.0
    %1377 = vmatpush1.msra.mxu0 0.0
    %1378 = vmatprep.subr.mxu0 0.0
    %1379 = vmatpush1.msra.mxu0 0.0
    %1380 = vmatprep.subr.mxu0 0.0
    %1381 = vmatpush1.msra.mxu0 0.0
    %1382 = vmatprep.subr.mxu0 0.0
    %1383 = vmatpush1.msra.mxu0 0.0
    %1384 = vmatprep.subr.mxu0 0.0
    %1385 = vmatpush1.msra.mxu0 0.0
    %1386 = vmatprep.subr.mxu0 0.0
    %1387 = vmatpush1.msra.mxu0 0.0
    %1388 = vmatprep.subr.mxu0 0.0
    %1389 = vmatpush1.msra.mxu0 0.0
    %1390 = vmatprep.subr.mxu0 0.0
    %1391 = vmatpush1.msra.mxu0 0.0
    %1392 = vmatprep.subr.mxu0 0.0
    %1393 = vmatpush1.msra.mxu0 0.0
    %1394 = vmatprep.mubr.f32.mxu0 0.0
    %1395 = vmatmul.mubr.f32.gmra.mrb[0].mxu0 %v1328
    %v1396 = vpop.f32.mrb[0].mxu0
    %v1397 = vadd.f32 0.0, %v1396
    %v1398 = vpop.f32.mrb[0].mxu0
    %1399 = vdwg.mxu0
    %1400 = vrot.lane.b32.xlu0 %v154, 40
    %v1401 = vpop.permute.xlu0 %1400
    %v1404 = vsel %vm160, %v1323, 0
    %1406 = vmatprep.subr.mxu0 0.0
    %1407 = vmatpush1.msra.mxu0 %v1401
    %1408 = vmatprep.subr.mxu0 0.0
    %1409 = vmatpush1.msra.mxu0 0.0
    %1410 = vmatprep.subr.mxu0 0.0
    %1411 = vmatpush1.msra.mxu0 0.0
    %1412 = vmatprep.subr.mxu0 0.0
    %1413 = vmatpush1.msra.mxu0 0.0
    %1414 = vmatprep.subr.mxu0 0.0
    %1415 = vmatpush1.msra.mxu0 0.0
    %1416 = vmatprep.subr.mxu0 0.0
    %1417 = vmatpush1.msra.mxu0 0.0
    %1418 = vmatprep.subr.mxu0 0.0
    %1419 = vmatpush1.msra.mxu0 0.0
    %1420 = vmatprep.subr.mxu0 0.0
    %1421 = vmatpush1.msra.mxu0 0.0
    %1422 = vmatprep.subr.mxu0 0.0
    %1423 = vmatpush1.msra.mxu0 0.0
    %1424 = vmatprep.subr.mxu0 0.0
    %1425 = vmatpush1.msra.mxu0 0.0
    %1426 = vmatprep.subr.mxu0 0.0
    %1427 = vmatpush1.msra.mxu0 0.0
    %1428 = vmatprep.subr.mxu0 0.0
    %1429 = vmatpush1.msra.mxu0 0.0
    %1430 = vmatprep.subr.mxu0 0.0
    %1431 = vmatpush1.msra.mxu0 0.0
    %1432 = vmatprep.subr.mxu0 0.0
    %1433 = vmatpush1.msra.mxu0 0.0
    %1434 = vmatprep.subr.mxu0 0.0
    %1435 = vmatpush1.msra.mxu0 0.0
    %1436 = vmatprep.subr.mxu0 0.0
    %1437 = vmatpush1.msra.mxu0 0.0
    %1438 = vmatprep.subr.mxu0 0.0
    %1439 = vmatpush1.msra.mxu0 0.0
    %1440 = vmatprep.subr.mxu0 0.0
    %1441 = vmatpush1.msra.mxu0 0.0
    %1442 = vmatprep.subr.mxu0 0.0
    %1443 = vmatpush1.msra.mxu0 0.0
    %1444 = vmatprep.subr.mxu0 0.0
    %1445 = vmatpush1.msra.mxu0 0.0
    %1446 = vmatprep.subr.mxu0 0.0
    %1447 = vmatpush1.msra.mxu0 0.0
    %1448 = vmatprep.subr.mxu0 0.0
    %1449 = vmatpush1.msra.mxu0 0.0
    %1450 = vmatprep.subr.mxu0 0.0
    %1451 = vmatpush1.msra.mxu0 0.0
    %1452 = vmatprep.subr.mxu0 0.0
    %1453 = vmatpush1.msra.mxu0 0.0
    %1454 = vmatprep.subr.mxu0 0.0
    %1455 = vmatpush1.msra.mxu0 0.0
    %1456 = vmatprep.subr.mxu0 0.0
    %1457 = vmatpush1.msra.mxu0 0.0
    %1458 = vmatprep.subr.mxu0 0.0
    %1459 = vmatpush1.msra.mxu0 0.0
    %1460 = vmatprep.subr.mxu0 0.0
    %1461 = vmatpush1.msra.mxu0 0.0
    %1462 = vmatprep.subr.mxu0 0.0
    %1463 = vmatpush1.msra.mxu0 0.0
    %1464 = vmatprep.subr.mxu0 0.0
    %1465 = vmatpush1.msra.mxu0 0.0
    %1466 = vmatprep.subr.mxu0 0.0
    %1467 = vmatpush1.msra.mxu0 0.0
    %1468 = vmatprep.subr.mxu0 0.0
    %1469 = vmatpush1.msra.mxu0 0.0
    %1470 = vmatprep.mubr.f32.mxu0 0.0
    %1471 = vmatmul.mubr.f32.gmra.mrb[0].mxu0 %v1404
    %v1472 = vpop.f32.mrb[0].mxu0
    %v1473 = vadd.f32 0.0, %v1472
    %v1474 = vpop.f32.mrb[0].mxu0
    %1475 = vdwg.mxu0
    %1478 = vrot.lane.b32.xlu0 %v737, 8
    %v1479 = vpop.permute.xlu0 %1478
    %1480 = vrot.lane.b32.xlu0 %v813, 8
    %v1481 = vpop.permute.xlu0 %1480
    %1486 = vrot.lane.b32.xlu0 %v1067, 16
    %v1487 = vpop.permute.xlu0 %1486
    %1488 = vrot.lane.b32.xlu0 %v1143, 16
    %v1489 = vpop.permute.xlu0 %1488
    %1494 = vrot.lane.b32.xlu0 %v1397, 24
    %v1495 = vpop.permute.xlu0 %1494
    %1496 = vrot.lane.b32.xlu0 %v1473, 24
    %v1497 = vpop.permute.xlu0 %1496
    %v1500 = vsel %vm160, %v407, %v1479
    %v1501 = vsel %vm160, %v483, %v1481
    %vm1502 = vcmask 130048
    %v1503 = vsel %vm1502, %v1500, %v1487
    %v1504 = vsel %vm1502, %v1501, %v1489
    %vm1505 = vcmask 195584
    %v1506 = vsel %vm1505, %v1503, %v1495
    %v1507 = vsel %vm1505, %v1504, %v1497
    %v1508 = vld [vmem:[#allocation7] sm:$0xff]
    %v1509 = vld [vmem:[#allocation7 + $0x8] sm:$0xff]
    %v1510 = vld [vmem:[#allocation7 + $0x10] sm:$0xff]
    %v1511 = vld [vmem:[#allocation7 + $0x18] sm:$0xff]
    %v1512 = vld [vmem:[%s4] sm:$0x1]
    %v1514 = vlaneseq
    %v1515 = vshrl.u32 %v1514, 7
    %v1516 = vsub.s32 0, %v1515
    %v1517 = vrot.slane %v1512, %v1516
    %v1520 = vsel %vm75, %v1506, 0
    %v1523 = vsel %vm75, %v1507, 0
    %1525 = vmatprep.subr.mxu0 0.0
    %1526 = vmatpush1.msra.mxu0 %v1508
    %1527 = vmatprep.subr.mxu0 0.0
    %1528 = vmatpush1.msra.mxu0 %v1509
    %1529 = vmatprep.subr.mxu0 0.0
    %1530 = vmatpush1.msra.mxu0 %v1510
    %1531 = vmatprep.subr.mxu0 0.0
    %1532 = vmatpush1.msra.mxu0 %v1511
    %1533 = vmatprep.subr.mxu0 0.0
    %1534 = vmatpush1.msra.mxu0 0.0
    %1535 = vmatprep.subr.mxu0 0.0
    %1536 = vmatpush1.msra.mxu0 0.0
    %1537 = vmatprep.subr.mxu0 0.0
    %1538 = vmatpush1.msra.mxu0 0.0
    %1539 = vmatprep.subr.mxu0 0.0
    %1540 = vmatpush1.msra.mxu0 0.0
    %1541 = vmatprep.subr.mxu0 0.0
    %1542 = vmatpush1.msra.mxu0 0.0
    %1543 = vmatprep.subr.mxu0 0.0
    %1544 = vmatpush1.msra.mxu0 0.0
    %1545 = vmatprep.subr.mxu0 0.0
    %1546 = vmatpush1.msra.mxu0 0.0
    %1547 = vmatprep.subr.mxu0 0.0
    %1548 = vmatpush1.msra.mxu0 0.0
    %1549 = vmatprep.subr.mxu0 0.0
    %1550 = vmatpush1.msra.mxu0 0.0
    %1551 = vmatprep.subr.mxu0 0.0
    %1552 = vmatpush1.msra.mxu0 0.0
    %1553 = vmatprep.subr.mxu0 0.0
    %1554 = vmatpush1.msra.mxu0 0.0
    %1555 = vmatprep.subr.mxu0 0.0
    %1556 = vmatpush1.msra.mxu0 0.0
    %1557 = vmatprep.subr.mxu0 0.0
    %1558 = vmatpush1.msra.mxu0 0.0
    %1559 = vmatprep.subr.mxu0 0.0
    %1560 = vmatpush1.msra.mxu0 0.0
    %1561 = vmatprep.subr.mxu0 0.0
    %1562 = vmatpush1.msra.mxu0 0.0
    %1563 = vmatprep.subr.mxu0 0.0
    %1564 = vmatpush1.msra.mxu0 0.0
    %1565 = vmatprep.subr.mxu0 0.0
    %1566 = vmatpush1.msra.mxu0 0.0
    %1567 = vmatprep.subr.mxu0 0.0
    %1568 = vmatpush1.msra.mxu0 0.0
    %1569 = vmatprep.subr.mxu0 0.0
    %1570 = vmatpush1.msra.mxu0 0.0
    %1571 = vmatprep.subr.mxu0 0.0
    %1572 = vmatpush1.msra.mxu0 0.0
    %1573 = vmatprep.subr.mxu0 0.0
    %1574 = vmatpush1.msra.mxu0 0.0
    %1575 = vmatprep.subr.mxu0 0.0
    %1576 = vmatpush1.msra.mxu0 0.0
    %1577 = vmatprep.subr.mxu0 0.0
    %1578 = vmatpush1.msra.mxu0 0.0
    %1579 = vmatprep.subr.mxu0 0.0
    %1580 = vmatpush1.msra.mxu0 0.0
    %1581 = vmatprep.subr.mxu0 0.0
    %1582 = vmatpush1.msra.mxu0 0.0
    %1583 = vmatprep.subr.mxu0 0.0
    %1584 = vmatpush1.msra.mxu0 0.0
    %1585 = vmatprep.subr.mxu0 0.0
    %1586 = vmatpush1.msra.mxu0 0.0
    %1587 = vmatprep.subr.mxu0 0.0
    %1588 = vmatpush1.msra.mxu0 0.0
    %1589 = vmatprep.mubr.f32.mxu0 0.0
    %1590 = vmatmul.mubr.f32.gmra.mrb[0].mxu0 %v1520
    %v1591 = vpop.f32.mrb[0].mxu0
    %v1592 = vadd.f32 %v1517, %v1591
    %v1593 = vpop.f32.mrb[0].mxu0
    %1594 = vmatprep.mubr.f32.mxu0 0.0
    %1595 = vmatmul.mubr.f32.gmra.mrb[0].mxu0 %v1523
    %v1596 = vpop.f32.mrb[0].mxu0
    %v1597 = vadd.f32 %v1517, %v1596
    %v1598 = vpop.f32.mrb[0].mxu0
    %1599 = vdwg.mxu0
    %1600 = vst.msk [vmem:[#allocation8] sm:$0xff] %vm75, %v1592
    %1601 = vst.msk [vmem:[#allocation8 + $0x8] sm:$0xff] %vm75, %v1597
    // Predicated region
    $region34: #{tpu_custom_call.1} parent=1 // pred_check
      _
    $region35: #{tpu_custom_call.1} parent=1 // pred_check_branch
      %1603 = sbr.rel (0) target = $region37
    $region36: #{tpu_custom_call.1} parent=1 // pred_region
      %s1605 = ssub.s32 256, 256
      %1606 = vsyncadd [#allocation4], %s1605
      %s1607 = sshll.u32 [#allocation8], 4
      %s1608 = int_to_ptr.vmem [resolvable:$true] %s1607
      %1613 = dma.vmem_to_hbm [thread:$0]  %s1608, 256, %s5, [#allocation4], 128, 128, 8
    $region37: #{tpu_custom_call.1} parent=1 // pred_fallthru
      _
    // Predicated region
    $region38: #{tpu_custom_call.1} parent=1 // pred_check
      _
    $region39: #{tpu_custom_call.1} parent=1 // pred_check_branch
      %1615 = sbr.rel (0) target = $region41
    $region40: #{tpu_custom_call.1} parent=1 // pred_region
      %1616 = dma.done [#allocation4], 256
    $region41: #{tpu_custom_call.1} parent=1 // pred_fallthru
      _
    %1617 = vsyncpa [#allocation3], 1
    %1618 = vsyncpa [#allocation6], 1
    %1619 = vsyncpa [#allocation4], 1

</llo_original>
